<compile_context>
chip_gen: v7x
topology: tpu7x:2x2x1
jax: 0.10.0
libtpu: 0.0.40
codegen_flags: <defaults>
</compile_context>

<pallas_src>
import jax
import jax.numpy as jnp
from jax.experimental import pallas as pl
from jax.experimental.pallas import tpu as pltpu

NEG_SLOPE = 0.01  # torch leaky_relu default
C1 = 64           # conv1 output channels
HID = 30          # fc hidden width


def _lrelu(x):
    return jnp.where(x > 0, x, NEG_SLOPE * x)


def convlang_kernel(x_ref, w1_ref, b1_ref, w2_ref, b2_ref,
                    fc1w_ref, fc1b_ref, fc2w_ref, fc2b_ref,
                    outw_ref, outb_ref, o_ref):
    bf16 = jnp.bfloat16
    f32 = jnp.float32

    # ---- conv1: banded matmul  x (TB, W*V) @ W1_band (W*V, W2*C1) ----------
    # x arrives f32 from HBM and is cast to bf16 here (one VPU pass, no extra
    # HBM traffic); accumulation is f32 on the MXU.
    x = x_ref[...].astype(bf16)
    h1 = jnp.dot(x, w1_ref[...], preferred_element_type=f32)
    h1 = _lrelu(h1 + b1_ref[...])                     # (TB, W2*C1) f32

    # ---- conv2: banded matmul on the (w, c)-flattened conv1 output ---------
    h2 = jnp.dot(h1.astype(bf16), w2_ref[...], preferred_element_type=f32)
    h2 = _lrelu(h2 + b2_ref[...])                     # (TB, W4) f32

    # ---- fc chain -----------------------------------------------------------
    h3 = _lrelu(jnp.dot(h2.astype(bf16), fc1w_ref[...],
                        preferred_element_type=f32) + fc1b_ref[...])
    h4 = _lrelu(jnp.dot(h3.astype(bf16), fc2w_ref[...],
                        preferred_element_type=f32) + fc2b_ref[...])
    out = (jnp.dot(h4.astype(bf16), outw_ref[...],
                   preferred_element_type=f32) + outb_ref[...])   # (TB, L)

    # Writeback: either the plain (TB, L) slab or a lane-dense
    # (TB*L/128, 128) slab (same bytes, unmasked full-width stores).
    o_ref[...] = out.reshape(o_ref.shape).astype(o_ref.dtype)


def _build_conv1_matrix(w1, word_length):
    """Fold conv1's (3, V, C1) kernel into a banded (W*V, W2*C1) weight so that
    x.reshape(B, W*V) @ mat equals the conv1 output flattened (w, c), c fastest."""
    kh, V, c1 = w1.shape
    W2 = word_length - 2
    w1f = w1.reshape(kh * V, c1)
    mat = jnp.zeros((word_length * V, W2 * c1), w1.dtype)
    for w in range(W2):
        mat = mat.at[w * V:(w + kh) * V, w * c1:(w + 1) * c1].set(w1f)
    return mat


def _build_conv2_matrix(w2, word_length):
    """Fold conv2's (3, C1) kernel into a banded (W2*C1, W4) matmul weight."""
    W2, W4 = word_length - 2, word_length - 4
    c1 = w2.shape[1]
    cols = []
    for w in range(W4):
        col = jnp.zeros((W2, c1), w2.dtype)
        col = col.at[w:w + 3, :].set(w2)              # rows (w..w+2) get the taps
        cols.append(col.reshape(-1))
    return jnp.stack(cols, axis=1)                    # (W2*C1, W4)


def _pick_batch_tile(B, block_b):
    """Pick (TB, B_pad): a multiple-of-8 tile dividing B_pad, preferring >=2
    grid steps (v7x has 2 TensorCores) and the largest tile under block_b.
    Avoids any padding copy whenever B has a suitable divisor."""
    if B <= 8:
        return B, B                                   # single full-dim block
    limit = min(block_b, B)
    cands = [t for t in range(8, limit + 1, 8) if B % t == 0]
    if cands:
        two_step = [t for t in cands if B // t >= 2]
        return (max(two_step) if two_step else max(cands)), B
    if B <= block_b:
        return B, B                                   # one full-dim block, no pad
    # Rare fallback: pad to the next multiple of 8 and tile that.
    B_pad = ((B + 7) // 8) * 8
    cands = [t for t in range(8, min(block_b, B_pad) + 1, 8) if B_pad % t == 0]
    two_step = [t for t in cands if B_pad // t >= 2]
    return (max(two_step) if two_step else max(cands)), B_pad


def convlang_forward(x, params, *, block_b=2048):
    B, W, V = x.shape
    W2, W4 = W - 2, W - 4
    L = params["out_b"].shape[-1]

    TB, B_pad = _pick_batch_tile(B, block_b)

    # x stays f32; the (B, W, V) -> (B, W*V) collapse is a free row-major
    # reshape, and the kernel then reads lane-dense W*V-wide rows.
    x2 = x.reshape(B, W * V)
    if B_pad != B:
        # Rare fallback; the tile picker avoids this whenever B has a
        # multiple-of-8 divisor, so the common path never copies x.
        x2 = jnp.pad(x2, ((0, B_pad - B), (0, 0)))

    bf16 = jnp.bfloat16
    w1_band = _build_conv1_matrix(params["w1"], W).astype(bf16)   # (W*V, W2*C1)
    b1_big = jnp.tile(params["b1"], (1, W2))                      # (1, W2*C1) f32
    w2_band = _build_conv2_matrix(params["w2"], W).astype(bf16)   # (W2*C1, W4)
    b2_big = jnp.tile(params["b2"], (1, W4))                      # (1, W4) f32
    weights = (w1_band, b1_big, w2_band, b2_big,
               params["fc1_w"].astype(bf16), params["fc1_b"],
               params["fc2_w"].astype(bf16), params["fc2_b"],
               params["out_w"].astype(bf16), params["out_b"])

    def const_spec(a):
        # Full-array block, constant index map -> weight stays VMEM-resident
        # across grid steps (never re-fetched).
        return pl.BlockSpec(a.shape, lambda i, _nd=a.ndim: (0,) * _nd)

    # Lane-dense output packing: only when the reshape target keeps legal
    # (8,128)-aligned blocks; otherwise write the small (TB, L) slab.
    rows_per_block = (TB * L) // 128 if (TB * L) % 128 == 0 else 0
    lane_dense = rows_per_block > 0 and (B_pad == TB or rows_per_block % 8 == 0)
    if lane_dense:
        out_shape = jax.ShapeDtypeStruct((B_pad * L // 128, 128), jnp.float32)
        out_spec = pl.BlockSpec((rows_per_block, 128), lambda i: (i, 0))
    else:
        out_shape = jax.ShapeDtypeStruct((B_pad, L), jnp.float32)
        out_spec = pl.BlockSpec((TB, L), lambda i: (i, 0))

    flops = 2 * B_pad * (W * V * W2 * C1 + W2 * C1 * W4
                         + W4 * HID + HID * HID + HID * L)
    bytes_accessed = (x2.size * x2.dtype.itemsize
                      + sum(int(w.size) * w.dtype.itemsize for w in weights)
                      + B_pad * L * 4)

    out = pl.pallas_call(
        convlang_kernel,
        out_shape=out_shape,
        grid=(B_pad // TB,),
        in_specs=[pl.BlockSpec((TB, W * V), lambda i: (i, 0))]
                 + [const_spec(w) for w in weights],
        out_specs=out_spec,
        compiler_params=pltpu.CompilerParams(
            dimension_semantics=("parallel",),
            vmem_limit_bytes=48 * 1024 * 1024),
        cost_estimate=pl.CostEstimate(
            flops=flops, transcendentals=0, bytes_accessed=bytes_accessed),
    )(x2, *weights)

    return out.reshape(B_pad, L)[:B]


def init_params(key, vector_size, word_length, num_languages):
    ks = jax.random.split(key, 10)
    rnd = lambda k, shape: 0.1 * jax.random.normal(k, shape, jnp.float32)
    return dict(
        # conv1 weight: torch (C1, 1, 3, V) stored here as (3, V, C1)
        w1=rnd(ks[0], (3, vector_size, C1)),
        b1=rnd(ks[1], (1, C1)),
        # conv2 weight: torch (1, C1, 3, 1) stored here as (3, C1)
        w2=rnd(ks[2], (3, C1)),
        b2=rnd(ks[3], (1, 1)),
        # Linear weights stored already transposed: y = x @ W + b
        fc1_w=rnd(ks[4], (word_length - 4, HID)),
        fc1_b=rnd(ks[5], (1, HID)),
        fc2_w=rnd(ks[6], (HID, HID)),
        fc2_b=rnd(ks[7], (1, HID)),
        out_w=rnd(ks[8], (HID, num_languages)),
        out_b=rnd(ks[9], (1, num_languages)),
    )


def reference_forward(x, p):
    """Pure-JAX f32 reference matching the PyTorch module semantics."""
    B, W, V = x.shape
    W2, W4 = W - 2, W - 4
    patches = jnp.stack([x[:, kh:kh + W2, :] for kh in range(3)], axis=2)  # (B,W2,3,V)
    h1 = jnp.einsum("bwkv,kvc->bwc", patches, p["w1"]) + p["b1"][None]
    h1 = jnp.where(h1 > 0, h1, NEG_SLOPE * h1)
    h2 = sum(jnp.einsum("bwc,c->bw", h1[:, kh:kh + W4, :], p["w2"][kh])
             for kh in range(3)) + p["b2"]
    h2 = jnp.where(h2 > 0, h2, NEG_SLOPE * h2)
    h3 = h2 @ p["fc1_w"] + p["fc1_b"]
    h3 = jnp.where(h3 > 0, h3, NEG_SLOPE * h3)
    h4 = h3 @ p["fc2_w"] + p["fc2_b"]
    h4 = jnp.where(h4 > 0, h4, NEG_SLOPE * h4)
    return h4 @ p["out_w"] + p["out_b"]


if __name__ == "__main__":
    V, W, L = 16, 16, 4                 # vector_size, word_length, num_languages
    key = jax.random.PRNGKey(0)
    kx, kp = jax.random.split(key)
    params = init_params(kp, V, W, L)

    # Two batch sizes: a tiny single-block case and a multi-step grid that
    # exercises the >=2-step (v7x) path and the lane-dense output packing.
    for B in (8, 512):
        x = jax.random.normal(jax.random.fold_in(kx, B), (B, W, V), jnp.float32)
        out = jax.block_until_ready(convlang_forward(x, params))
        ref = reference_forward(x, params)
        assert out.shape == (B, L), out.shape
        # bf16 operands on the MXU (f32 accumulation) -> small drift vs f32 ref.
        err = float(jnp.max(jnp.abs(out - ref)))
        assert jnp.allclose(out, ref, atol=3e-2, rtol=3e-2), err
    print("KERNEL_OK")
</pallas_src>

<mosaic_0001>
module attributes {stable_mosaic.version = 11 : i64} {
  func.func @convlang_kernel(%arg0: i32, %arg1: memref<8x256xf32, #tpu.memory_space<vmem>>, %arg2: memref<256x896xbf16, #tpu.memory_space<vmem>>, %arg3: memref<1x896xf32, #tpu.memory_space<vmem>>, %arg4: memref<896x12xbf16, #tpu.memory_space<vmem>>, %arg5: memref<1x12xf32, #tpu.memory_space<vmem>>, %arg6: memref<12x30xbf16, #tpu.memory_space<vmem>>, %arg7: memref<1x30xf32, #tpu.memory_space<vmem>>, %arg8: memref<30x30xbf16, #tpu.memory_space<vmem>>, %arg9: memref<1x30xf32, #tpu.memory_space<vmem>>, %arg10: memref<30x4xbf16, #tpu.memory_space<vmem>>, %arg11: memref<1x4xf32, #tpu.memory_space<vmem>>, %arg12: memref<8x4xf32, #tpu.memory_space<vmem>>) attributes {dimension_semantics = [#tpu.dimension_semantics<parallel>], iteration_bounds = array<i64: 1>, scalar_prefetch = 0 : i64, scratch_operands = 0 : i64, tpu.core_type = #tpu.core_type<tc>, window_params = [{transform_indices = @transform_0, window_bounds = array<i64: 8, 256>}, {pipeline_mode = #tpu.pipeline_mode<synchronous>, transform_indices = @transform_1, window_bounds = array<i64: 256, 896>}, {pipeline_mode = #tpu.pipeline_mode<synchronous>, transform_indices = @transform_2, window_bounds = array<i64: 1, 896>}, {pipeline_mode = #tpu.pipeline_mode<synchronous>, transform_indices = @transform_3, window_bounds = array<i64: 896, 12>}, {pipeline_mode = #tpu.pipeline_mode<synchronous>, transform_indices = @transform_4, window_bounds = array<i64: 1, 12>}, {pipeline_mode = #tpu.pipeline_mode<synchronous>, transform_indices = @transform_5, window_bounds = array<i64: 12, 30>}, {pipeline_mode = #tpu.pipeline_mode<synchronous>, transform_indices = @transform_6, window_bounds = array<i64: 1, 30>}, {pipeline_mode = #tpu.pipeline_mode<synchronous>, transform_indices = @transform_7, window_bounds = array<i64: 30, 30>}, {pipeline_mode = #tpu.pipeline_mode<synchronous>, transform_indices = @transform_8, window_bounds = array<i64: 1, 30>}, {pipeline_mode = #tpu.pipeline_mode<synchronous>, transform_indices = @transform_9, window_bounds = array<i64: 30, 4>}, {pipeline_mode = #tpu.pipeline_mode<synchronous>, transform_indices = @transform_10, window_bounds = array<i64: 1, 4>}, {transform_indices = @transform_11, window_bounds = array<i64: 8, 4>}]} {
    %c0 = arith.constant 0 : index
    %c0_0 = arith.constant 0 : index
    %0 = vector.load %arg1[%c0, %c0_0] : memref<8x256xf32, #tpu.memory_space<vmem>>, vector<8x256xf32>
    %1 = arith.truncf %0 : vector<8x256xf32> to vector<8x256xbf16>
    %c0_1 = arith.constant 0 : index
    %c0_2 = arith.constant 0 : index
    %2 = vector.load %arg2[%c0_1, %c0_2] : memref<256x896xbf16, #tpu.memory_space<vmem>>, vector<256x896xbf16>
    %cst = arith.constant dense<0.000000e+00> : vector<8x896xf32>
    %3 = tpu.matmul %1, %2, %cst {dimension_numbers = #tpu.dot_dimension_numbers<[1], [0], [0], [1], [0, 0, 1, 1], [], []>} : vector<8x256xbf16>, vector<256x896xbf16>, vector<8x896xf32> -> vector<8x896xf32>
    %c0_3 = arith.constant 0 : index
    %c0_4 = arith.constant 0 : index
    %4 = vector.load %arg3[%c0_3, %c0_4] : memref<1x896xf32, #tpu.memory_space<vmem>>, vector<1x896xf32>
    %5 = vector.broadcast %4 : vector<1x896xf32> to vector<8x896xf32>
    %6 = arith.addf %3, %5 : vector<8x896xf32>
    %cst_5 = arith.constant 0.000000e+00 : f32
    %7 = vector.broadcast %cst_5 : f32 to vector<8x896xf32>
    %8 = arith.cmpf ogt, %6, %7 : vector<8x896xf32>
    %cst_6 = arith.constant 0.00999999977 : f32
    %9 = vector.broadcast %cst_6 : f32 to vector<8x896xf32>
    %10 = arith.mulf %9, %6 : vector<8x896xf32>
    %11 = arith.select %8, %6, %10 : vector<8x896xi1>, vector<8x896xf32>
    %12 = arith.truncf %11 : vector<8x896xf32> to vector<8x896xbf16>
    %c0_7 = arith.constant 0 : index
    %c0_8 = arith.constant 0 : index
    %13 = vector.load %arg4[%c0_7, %c0_8] : memref<896x12xbf16, #tpu.memory_space<vmem>>, vector<896x12xbf16>
    %cst_9 = arith.constant dense<0.000000e+00> : vector<8x12xf32>
    %14 = tpu.matmul %12, %13, %cst_9 {dimension_numbers = #tpu.dot_dimension_numbers<[1], [0], [0], [1], [0, 0, 1, 1], [], []>} : vector<8x896xbf16>, vector<896x12xbf16>, vector<8x12xf32> -> vector<8x12xf32>
    %c0_10 = arith.constant 0 : index
    %c0_11 = arith.constant 0 : index
    %15 = vector.load %arg5[%c0_10, %c0_11] : memref<1x12xf32, #tpu.memory_space<vmem>>, vector<1x12xf32>
    %16 = vector.broadcast %15 : vector<1x12xf32> to vector<8x12xf32>
    %17 = arith.addf %14, %16 : vector<8x12xf32>
    %cst_12 = arith.constant 0.000000e+00 : f32
    %18 = vector.broadcast %cst_12 : f32 to vector<8x12xf32>
    %19 = arith.cmpf ogt, %17, %18 : vector<8x12xf32>
    %cst_13 = arith.constant 0.00999999977 : f32
    %20 = vector.broadcast %cst_13 : f32 to vector<8x12xf32>
    %21 = arith.mulf %20, %17 : vector<8x12xf32>
    %22 = arith.select %19, %17, %21 : vector<8x12xi1>, vector<8x12xf32>
    %23 = arith.truncf %22 : vector<8x12xf32> to vector<8x12xbf16>
    %c0_14 = arith.constant 0 : index
    %c0_15 = arith.constant 0 : index
    %24 = vector.load %arg6[%c0_14, %c0_15] : memref<12x30xbf16, #tpu.memory_space<vmem>>, vector<12x30xbf16>
    %cst_16 = arith.constant dense<0.000000e+00> : vector<8x30xf32>
    %25 = tpu.matmul %23, %24, %cst_16 {dimension_numbers = #tpu.dot_dimension_numbers<[1], [0], [0], [1], [0, 0, 1, 1], [], []>} : vector<8x12xbf16>, vector<12x30xbf16>, vector<8x30xf32> -> vector<8x30xf32>
    %c0_17 = arith.constant 0 : index
    %c0_18 = arith.constant 0 : index
    %26 = vector.load %arg7[%c0_17, %c0_18] : memref<1x30xf32, #tpu.memory_space<vmem>>, vector<1x30xf32>
    %27 = vector.broadcast %26 : vector<1x30xf32> to vector<8x30xf32>
    %28 = arith.addf %25, %27 : vector<8x30xf32>
    %cst_19 = arith.constant 0.000000e+00 : f32
    %29 = vector.broadcast %cst_19 : f32 to vector<8x30xf32>
    %30 = arith.cmpf ogt, %28, %29 : vector<8x30xf32>
    %cst_20 = arith.constant 0.00999999977 : f32
    %31 = vector.broadcast %cst_20 : f32 to vector<8x30xf32>
    %32 = arith.mulf %31, %28 : vector<8x30xf32>
    %33 = arith.select %30, %28, %32 : vector<8x30xi1>, vector<8x30xf32>
    %34 = arith.truncf %33 : vector<8x30xf32> to vector<8x30xbf16>
    %c0_21 = arith.constant 0 : index
    %c0_22 = arith.constant 0 : index
    %35 = vector.load %arg8[%c0_21, %c0_22] : memref<30x30xbf16, #tpu.memory_space<vmem>>, vector<30x30xbf16>
    %cst_23 = arith.constant dense<0.000000e+00> : vector<8x30xf32>
    %36 = tpu.matmul %34, %35, %cst_23 {dimension_numbers = #tpu.dot_dimension_numbers<[1], [0], [0], [1], [0, 0, 1, 1], [], []>} : vector<8x30xbf16>, vector<30x30xbf16>, vector<8x30xf32> -> vector<8x30xf32>
    %c0_24 = arith.constant 0 : index
    %c0_25 = arith.constant 0 : index
    %37 = vector.load %arg9[%c0_24, %c0_25] : memref<1x30xf32, #tpu.memory_space<vmem>>, vector<1x30xf32>
    %38 = vector.broadcast %37 : vector<1x30xf32> to vector<8x30xf32>
    %39 = arith.addf %36, %38 : vector<8x30xf32>
    %cst_26 = arith.constant 0.000000e+00 : f32
    %40 = vector.broadcast %cst_26 : f32 to vector<8x30xf32>
    %41 = arith.cmpf ogt, %39, %40 : vector<8x30xf32>
    %cst_27 = arith.constant 0.00999999977 : f32
    %42 = vector.broadcast %cst_27 : f32 to vector<8x30xf32>
    %43 = arith.mulf %42, %39 : vector<8x30xf32>
    %44 = arith.select %41, %39, %43 : vector<8x30xi1>, vector<8x30xf32>
    %45 = arith.truncf %44 : vector<8x30xf32> to vector<8x30xbf16>
    %c0_28 = arith.constant 0 : index
    %c0_29 = arith.constant 0 : index
    %46 = vector.load %arg10[%c0_28, %c0_29] : memref<30x4xbf16, #tpu.memory_space<vmem>>, vector<30x4xbf16>
    %cst_30 = arith.constant dense<0.000000e+00> : vector<8x4xf32>
    %47 = tpu.matmul %45, %46, %cst_30 {dimension_numbers = #tpu.dot_dimension_numbers<[1], [0], [0], [1], [0, 0, 1, 1], [], []>} : vector<8x30xbf16>, vector<30x4xbf16>, vector<8x4xf32> -> vector<8x4xf32>
    %c0_31 = arith.constant 0 : index
    %c0_32 = arith.constant 0 : index
    %48 = vector.load %arg11[%c0_31, %c0_32] : memref<1x4xf32, #tpu.memory_space<vmem>>, vector<1x4xf32>
    %49 = vector.broadcast %48 : vector<1x4xf32> to vector<8x4xf32>
    %50 = arith.addf %47, %49 : vector<8x4xf32>
    %c0_33 = arith.constant 0 : index
    %c0_34 = arith.constant 0 : index
    %51 = vector.load %arg12[%c0_33, %c0_34] : memref<8x4xf32, #tpu.memory_space<vmem>>, vector<8x4xf32>
    tpu.vector_store %arg12[%c0_33, %c0_34], %50 {strides = array<i32>} : memref<8x4xf32, #tpu.memory_space<vmem>>, vector<8x4xf32>,
    return
  }
  func.func @transform_0(%arg0: i32) -> (i32, i32) {
    %c0_i32 = arith.constant 0 : i32
    %c0_i32_0 = arith.constant 0 : i32
    return %arg0, %c0_i32 : i32, i32
  }
  func.func @transform_1(%arg0: i32) -> (i32, i32) {
    %c0_i32 = arith.constant 0 : i32
    %c0_i32_0 = arith.constant 0 : i32
    %c0_i32_1 = arith.constant 0 : i32
    return %c0_i32, %c0_i32_0 : i32, i32
  }
  func.func @transform_2(%arg0: i32) -> (i32, i32) {
    %c0_i32 = arith.constant 0 : i32
    %c0_i32_0 = arith.constant 0 : i32
    %c0_i32_1 = arith.constant 0 : i32
    return %c0_i32, %c0_i32_0 : i32, i32
  }
  func.func @transform_3(%arg0: i32) -> (i32, i32) {
    %c0_i32 = arith.constant 0 : i32
    %c0_i32_0 = arith.constant 0 : i32
    %c0_i32_1 = arith.constant 0 : i32
    return %c0_i32, %c0_i32_0 : i32, i32
  }
  func.func @transform_4(%arg0: i32) -> (i32, i32) {
    %c0_i32 = arith.constant 0 : i32
    %c0_i32_0 = arith.constant 0 : i32
    %c0_i32_1 = arith.constant 0 : i32
    return %c0_i32, %c0_i32_0 : i32, i32
  }
  func.func @transform_5(%arg0: i32) -> (i32, i32) {
    %c0_i32 = arith.constant 0 : i32
    %c0_i32_0 = arith.constant 0 : i32
    %c0_i32_1 = arith.constant 0 : i32
    return %c0_i32, %c0_i32_0 : i32, i32
  }
  func.func @transform_6(%arg0: i32) -> (i32, i32) {
    %c0_i32 = arith.constant 0 : i32
    %c0_i32_0 = arith.constant 0 : i32
    %c0_i32_1 = arith.constant 0 : i32
    return %c0_i32, %c0_i32_0 : i32, i32
  }
  func.func @transform_7(%arg0: i32) -> (i32, i32) {
    %c0_i32 = arith.constant 0 : i32
    %c0_i32_0 = arith.constant 0 : i32
    %c0_i32_1 = arith.constant 0 : i32
    return %c0_i32, %c0_i32_0 : i32, i32
  }
  func.func @transform_8(%arg0: i32) -> (i32, i32) {
    %c0_i32 = arith.constant 0 : i32
    %c0_i32_0 = arith.constant 0 : i32
    %c0_i32_1 = arith.constant 0 : i32
    return %c0_i32, %c0_i32_0 : i32, i32
  }
  func.func @transform_9(%arg0: i32) -> (i32, i32) {
    %c0_i32 = arith.constant 0 : i32
    %c0_i32_0 = arith.constant 0 : i32
    %c0_i32_1 = arith.constant 0 : i32
    return %c0_i32, %c0_i32_0 : i32, i32
  }
  func.func @transform_10(%arg0: i32) -> (i32, i32) {
    %c0_i32 = arith.constant 0 : i32
    %c0_i32_0 = arith.constant 0 : i32
    %c0_i32_1 = arith.constant 0 : i32
    return %c0_i32, %c0_i32_0 : i32, i32
  }
  func.func @transform_11(%arg0: i32) -> (i32, i32) {
    %c0_i32 = arith.constant 0 : i32
    %c0_i32_0 = arith.constant 0 : i32
    return %arg0, %c0_i32 : i32, i32
  }
}

</mosaic_0001>

<llo_original>
// kernel: tpu_custom_call.1
$region0: #{tpu_custom_call.1}
  #allocation0 [shape = 'u32[]', space=smem, size = 0x4, offset = 0x4, fixed_abs, tag = 'smem constant byte address 0x4 - core index']
  #allocation1 [shape = 'u32[144,128]{1,0:T(1,128)}', space=vmem, size = 0x12000, scoped, tag = 'internal scratch']
  %s0 = inlined_call_operand.vmem [shape: f32[8,256], index: 0, kind: input, shape index: {}]
  %s1 = inlined_call_operand.hbm [shape: bf16[256,896], index: 1, kind: input, shape index: {}]
  %s2 = inlined_call_operand.vmem [shape: f32[1,896], index: 2, kind: input, shape index: {}]
  %s3 = inlined_call_operand.vmem [shape: bf16[896,12], index: 3, kind: input, shape index: {}]
  %s4 = inlined_call_operand.vmem [shape: f32[1,12], index: 4, kind: input, shape index: {}]
  %s5 = inlined_call_operand.vmem [shape: bf16[12,30], index: 5, kind: input, shape index: {}]
  %s6 = inlined_call_operand.vmem [shape: f32[1,30], index: 6, kind: input, shape index: {}]
  %s7 = inlined_call_operand.vmem [shape: bf16[30,30], index: 7, kind: input, shape index: {}]
  %s8 = inlined_call_operand.vmem [shape: f32[1,30], index: 8, kind: input, shape index: {}]
  %s9 = inlined_call_operand.vmem [shape: bf16[30,4], index: 9, kind: input, shape index: {}]
  %s10 = inlined_call_operand.vmem [shape: f32[1,4], index: 10, kind: input, shape index: {}]
  %s11 = inlined_call_operand.vmem [shape: f32[8,4], index: 11, kind: output, shape index: {}]
  %s12 = sld [smem:[#allocation0]]
  $region58: #{tpu_custom_call.1} parent=0
    _
  %s14 = ssub.s32 1, %s12
  %s15 = scalar_select 0, %s14, %s12
  $region1: #{tpu_custom_call.1} parent=0
    #allocation2 [shape = 'u8[458752]{0}', space=vmem, size = 0x70000, scoped, tag = 'input window, operand 1, single buffered']
    #allocation3 [shape = 's32[1]{0}', space=sflag, size = 0x4, scoped, tag = 'scoped memory for tpu_custom_call.1']
    %16 = vsyncpa [#allocation3], 0
    // Predicated region
    $region2: #{tpu_custom_call.1} parent=1 // pred_check
      _
    $region3: #{tpu_custom_call.1} parent=1 // pred_check_branch
      %18 = sbr.rel (0) target = $region5
    $region4: #{tpu_custom_call.1} parent=1 // pred_region
      _
    $region5: #{tpu_custom_call.1} parent=1 // pred_fallthru
      _
    // Predicated region
    $region6: #{tpu_custom_call.1} parent=1 // pred_check
      _
    $region7: #{tpu_custom_call.1} parent=1 // pred_check_branch
      %20 = sbr.rel (0) target = $region9
    $region8: #{tpu_custom_call.1} parent=1 // pred_region
      %s22 = ssub.s32 14336, 14336
      %23 = vsyncadd [#allocation3], %s22
      %s24 = sshll.u32 [#allocation2], 4
      %s25 = int_to_ptr.vmem [resolvable:$true] %s24
      %30 = dma.hbm_to_vmem [thread:$0]  %s1, 14336, %s25, [#allocation3], 448, 448, 28
    $region9: #{tpu_custom_call.1} parent=1 // pred_fallthru
      _
    // Predicated region
    $region10: #{tpu_custom_call.1} parent=1 // pred_check
      _
    $region11: #{tpu_custom_call.1} parent=1 // pred_check_branch
      %32 = sbr.rel (0) target = $region13
    $region12: #{tpu_custom_call.1} parent=1 // pred_region
      _
    $region13: #{tpu_custom_call.1} parent=1 // pred_fallthru
      _
    // Predicated region
    $region14: #{tpu_custom_call.1} parent=1 // pred_check
      _
    $region15: #{tpu_custom_call.1} parent=1 // pred_check_branch
      %34 = sbr.rel (0) target = $region17
    $region16: #{tpu_custom_call.1} parent=1 // pred_region
      _
    $region17: #{tpu_custom_call.1} parent=1 // pred_fallthru
      _
    // Predicated region
    $region18: #{tpu_custom_call.1} parent=1 // pred_check
      _
    $region19: #{tpu_custom_call.1} parent=1 // pred_check_branch
      %36 = sbr.rel (0) target = $region21
    $region20: #{tpu_custom_call.1} parent=1 // pred_region
      _
    $region21: #{tpu_custom_call.1} parent=1 // pred_fallthru
      _
    // Predicated region
    $region22: #{tpu_custom_call.1} parent=1 // pred_check
      _
    $region23: #{tpu_custom_call.1} parent=1 // pred_check_branch
      %38 = sbr.rel (0) target = $region25
    $region24: #{tpu_custom_call.1} parent=1 // pred_region
      _
    $region25: #{tpu_custom_call.1} parent=1 // pred_fallthru
      _
    // Predicated region
    $region26: #{tpu_custom_call.1} parent=1 // pred_check
      _
    $region27: #{tpu_custom_call.1} parent=1 // pred_check_branch
      %40 = sbr.rel (0) target = $region29
    $region28: #{tpu_custom_call.1} parent=1 // pred_region
      _
    $region29: #{tpu_custom_call.1} parent=1 // pred_fallthru
      _
    // Predicated region
    $region30: #{tpu_custom_call.1} parent=1 // pred_check
      _
    $region31: #{tpu_custom_call.1} parent=1 // pred_check_branch
      %42 = sbr.rel (0) target = $region33
    $region32: #{tpu_custom_call.1} parent=1 // pred_region
      _
    $region33: #{tpu_custom_call.1} parent=1 // pred_fallthru
      _
    // Predicated region
    $region34: #{tpu_custom_call.1} parent=1 // pred_check
      _
    $region35: #{tpu_custom_call.1} parent=1 // pred_check_branch
      %44 = sbr.rel (0) target = $region37
    $region36: #{tpu_custom_call.1} parent=1 // pred_region
      _
    $region37: #{tpu_custom_call.1} parent=1 // pred_fallthru
      _
    // Predicated region
    $region38: #{tpu_custom_call.1} parent=1 // pred_check
      _
    $region39: #{tpu_custom_call.1} parent=1 // pred_check_branch
      %46 = sbr.rel (0) target = $region41
    $region40: #{tpu_custom_call.1} parent=1 // pred_region
      _
    $region41: #{tpu_custom_call.1} parent=1 // pred_fallthru
      _
    // Predicated region
    $region42: #{tpu_custom_call.1} parent=1 // pred_check
      _
    $region43: #{tpu_custom_call.1} parent=1 // pred_check_branch
      %48 = sbr.rel (0) target = $region45
    $region44: #{tpu_custom_call.1} parent=1 // pred_region
      _
    $region45: #{tpu_custom_call.1} parent=1 // pred_fallthru
      _
    // Predicated region
    $region46: #{tpu_custom_call.1} parent=1 // pred_check
      _
    $region47: #{tpu_custom_call.1} parent=1 // pred_check_branch
      %50 = sbr.rel (0) target = $region49
    $region48: #{tpu_custom_call.1} parent=1 // pred_region
      %51 = dma.done [#allocation3], 14336
    $region49: #{tpu_custom_call.1} parent=1 // pred_fallthru
      _
    %v53 = vld [vmem:[%s0] sm:$0xff]
    %v54 = vld [vmem:[%s0 + $0x8] sm:$0xff]
    %v55 = vpack.c.bf16 %v53, %v53
    %v56 = vpack.c.bf16 %v54, %v54
    %v57 = vld [vmem:[#allocation2] sm:$0xff]
    %v58 = vld [vmem:[#allocation2 + $0x8] sm:$0xff]
    %v59 = vld [vmem:[#allocation2 + $0x10] sm:$0xff]
    %v60 = vld [vmem:[#allocation2 + $0x18] sm:$0xf]
    %v61 = vld [vmem:[#allocation2 + $0x1c] sm:$0xff]
    %v62 = vld [vmem:[#allocation2 + $0x24] sm:$0xff]
    %v63 = vld [vmem:[#allocation2 + $0x2c] sm:$0xff]
    %v64 = vld [vmem:[#allocation2 + $0x34] sm:$0xf]
    %v65 = vld [vmem:[#allocation2 + $0x38] sm:$0xff]
    %v66 = vld [vmem:[#allocation2 + $0x40] sm:$0xff]
    %v67 = vld [vmem:[#allocation2 + $0x48] sm:$0xff]
    %v68 = vld [vmem:[#allocation2 + $0x50] sm:$0xf]
    %v69 = vld [vmem:[#allocation2 + $0x54] sm:$0xff]
    %v70 = vld [vmem:[#allocation2 + $0x5c] sm:$0xff]
    %v71 = vld [vmem:[#allocation2 + $0x64] sm:$0xff]
    %v72 = vld [vmem:[#allocation2 + $0x6c] sm:$0xf]
    %v73 = vld [vmem:[#allocation2 + $0x70] sm:$0xff]
    %v74 = vld [vmem:[#allocation2 + $0x78] sm:$0xff]
    %v75 = vld [vmem:[#allocation2 + $0x80] sm:$0xff]
    %v76 = vld [vmem:[#allocation2 + $0x88] sm:$0xf]
    %v77 = vld [vmem:[#allocation2 + $0x8c] sm:$0xff]
    %v78 = vld [vmem:[#allocation2 + $0x94] sm:$0xff]
    %v79 = vld [vmem:[#allocation2 + $0x9c] sm:$0xff]
    %v80 = vld [vmem:[#allocation2 + $0xa4] sm:$0xf]
    %v81 = vld [vmem:[#allocation2 + $0xa8] sm:$0xff]
    %v82 = vld [vmem:[#allocation2 + $0xb0] sm:$0xff]
    %v83 = vld [vmem:[#allocation2 + $0xb8] sm:$0xff]
    %v84 = vld [vmem:[#allocation2 + $0xc0] sm:$0xf]
    %v85 = vld [vmem:[#allocation2 + $0xc4] sm:$0xff]
    %v86 = vld [vmem:[#allocation2 + $0xcc] sm:$0xff]
    %v87 = vld [vmem:[#allocation2 + $0xd4] sm:$0xff]
    %v88 = vld [vmem:[#allocation2 + $0xdc] sm:$0xf]
    %v89 = vld [vmem:[#allocation2 + $0xe0] sm:$0xff]
    %v90 = vld [vmem:[#allocation2 + $0xe8] sm:$0xff]
    %v91 = vld [vmem:[#allocation2 + $0xf0] sm:$0xff]
    %v92 = vld [vmem:[#allocation2 + $0xf8] sm:$0xf]
    %v93 = vld [vmem:[#allocation2 + $0xfc] sm:$0xff]
    %v94 = vld [vmem:[#allocation2 + $0x104] sm:$0xff]
    %v95 = vld [vmem:[#allocation2 + $0x10c] sm:$0xff]
    %v96 = vld [vmem:[#allocation2 + $0x114] sm:$0xf]
    %v97 = vld [vmem:[#allocation2 + $0x118] sm:$0xff]
    %v98 = vld [vmem:[#allocation2 + $0x120] sm:$0xff]
    %v99 = vld [vmem:[#allocation2 + $0x128] sm:$0xff]
    %v100 = vld [vmem:[#allocation2 + $0x130] sm:$0xf]
    %v101 = vld [vmem:[#allocation2 + $0x134] sm:$0xff]
    %v102 = vld [vmem:[#allocation2 + $0x13c] sm:$0xff]
    %v103 = vld [vmem:[#allocation2 + $0x144] sm:$0xff]
    %v104 = vld [vmem:[#allocation2 + $0x14c] sm:$0xf]
    %v105 = vld [vmem:[#allocation2 + $0x150] sm:$0xff]
    %v106 = vld [vmem:[#allocation2 + $0x158] sm:$0xff]
    %v107 = vld [vmem:[#allocation2 + $0x160] sm:$0xff]
    %v108 = vld [vmem:[#allocation2 + $0x168] sm:$0xf]
    %v109 = vld [vmem:[#allocation2 + $0x16c] sm:$0xff]
    %v110 = vld [vmem:[#allocation2 + $0x174] sm:$0xff]
    %v111 = vld [vmem:[#allocation2 + $0x17c] sm:$0xff]
    %v112 = vld [vmem:[#allocation2 + $0x184] sm:$0xf]
    %v113 = vld [vmem:[#allocation2 + $0x188] sm:$0xff]
    %v114 = vld [vmem:[#allocation2 + $0x190] sm:$0xff]
    %v115 = vld [vmem:[#allocation2 + $0x198] sm:$0xff]
    %v116 = vld [vmem:[#allocation2 + $0x1a0] sm:$0xf]
    %v117 = vld [vmem:[#allocation2 + $0x1a4] sm:$0xff]
    %v118 = vld [vmem:[#allocation2 + $0x1ac] sm:$0xff]
    %v119 = vld [vmem:[#allocation2 + $0x1b4] sm:$0xff]
    %v120 = vld [vmem:[#allocation2 + $0x1bc] sm:$0xf]
    %v121 = vld [vmem:[#allocation2 + $0x1c0] sm:$0xff]
    %v122 = vld [vmem:[#allocation2 + $0x1c8] sm:$0xff]
    %v123 = vld [vmem:[#allocation2 + $0x1d0] sm:$0xff]
    %v124 = vld [vmem:[#allocation2 + $0x1d8] sm:$0xf]
    %v125 = vld [vmem:[#allocation2 + $0x1dc] sm:$0xff]
    %v126 = vld [vmem:[#allocation2 + $0x1e4] sm:$0xff]
    %v127 = vld [vmem:[#allocation2 + $0x1ec] sm:$0xff]
    %v128 = vld [vmem:[#allocation2 + $0x1f4] sm:$0xf]
    %v129 = vld [vmem:[#allocation2 + $0x1f8] sm:$0xff]
    %v130 = vld [vmem:[#allocation2 + $0x200] sm:$0xff]
    %v131 = vld [vmem:[#allocation2 + $0x208] sm:$0xff]
    %v132 = vld [vmem:[#allocation2 + $0x210] sm:$0xf]
    %v133 = vld [vmem:[#allocation2 + $0x214] sm:$0xff]
    %v134 = vld [vmem:[#allocation2 + $0x21c] sm:$0xff]
    %v135 = vld [vmem:[#allocation2 + $0x224] sm:$0xff]
    %v136 = vld [vmem:[#allocation2 + $0x22c] sm:$0xf]
    %v137 = vld [vmem:[#allocation2 + $0x230] sm:$0xff]
    %v138 = vld [vmem:[#allocation2 + $0x238] sm:$0xff]
    %v139 = vld [vmem:[#allocation2 + $0x240] sm:$0xff]
    %v140 = vld [vmem:[#allocation2 + $0x248] sm:$0xf]
    %v141 = vld [vmem:[#allocation2 + $0x24c] sm:$0xff]
    %v142 = vld [vmem:[#allocation2 + $0x254] sm:$0xff]
    %v143 = vld [vmem:[#allocation2 + $0x25c] sm:$0xff]
    %v144 = vld [vmem:[#allocation2 + $0x264] sm:$0xf]
    %v145 = vld [vmem:[#allocation2 + $0x268] sm:$0xff]
    %v146 = vld [vmem:[#allocation2 + $0x270] sm:$0xff]
    %v147 = vld [vmem:[#allocation2 + $0x278] sm:$0xff]
    %v148 = vld [vmem:[#allocation2 + $0x280] sm:$0xf]
    %v149 = vld [vmem:[#allocation2 + $0x284] sm:$0xff]
    %v150 = vld [vmem:[#allocation2 + $0x28c] sm:$0xff]
    %v151 = vld [vmem:[#allocation2 + $0x294] sm:$0xff]
    %v152 = vld [vmem:[#allocation2 + $0x29c] sm:$0xf]
    %v153 = vld [vmem:[#allocation2 + $0x2a0] sm:$0xff]
    %v154 = vld [vmem:[#allocation2 + $0x2a8] sm:$0xff]
    %v155 = vld [vmem:[#allocation2 + $0x2b0] sm:$0xff]
    %v156 = vld [vmem:[#allocation2 + $0x2b8] sm:$0xf]
    %v157 = vld [vmem:[#allocation2 + $0x2bc] sm:$0xff]
    %v158 = vld [vmem:[#allocation2 + $0x2c4] sm:$0xff]
    %v159 = vld [vmem:[#allocation2 + $0x2cc] sm:$0xff]
    %v160 = vld [vmem:[#allocation2 + $0x2d4] sm:$0xf]
    %v161 = vld [vmem:[#allocation2 + $0x2d8] sm:$0xff]
    %v162 = vld [vmem:[#allocation2 + $0x2e0] sm:$0xff]
    %v163 = vld [vmem:[#allocation2 + $0x2e8] sm:$0xff]
    %v164 = vld [vmem:[#allocation2 + $0x2f0] sm:$0xf]
    %v165 = vld [vmem:[#allocation2 + $0x2f4] sm:$0xff]
    %v166 = vld [vmem:[#allocation2 + $0x2fc] sm:$0xff]
    %v167 = vld [vmem:[#allocation2 + $0x304] sm:$0xff]
    %v168 = vld [vmem:[#allocation2 + $0x30c] sm:$0xf]
    %v169 = vld [vmem:[#allocation2 + $0x310] sm:$0xff]
    %v170 = vld [vmem:[#allocation2 + $0x318] sm:$0xff]
    %v171 = vld [vmem:[#allocation2 + $0x320] sm:$0xff]
    %v172 = vld [vmem:[#allocation2 + $0x328] sm:$0xf]
    %v173 = vld [vmem:[#allocation2 + $0x32c] sm:$0xff]
    %v174 = vld [vmem:[#allocation2 + $0x334] sm:$0xff]
    %v175 = vld [vmem:[#allocation2 + $0x33c] sm:$0xff]
    %v176 = vld [vmem:[#allocation2 + $0x344] sm:$0xf]
    %v177 = vld [vmem:[#allocation2 + $0x348] sm:$0xff]
    %v178 = vld [vmem:[#allocation2 + $0x350] sm:$0xff]
    %v179 = vld [vmem:[#allocation2 + $0x358] sm:$0xff]
    %v180 = vld [vmem:[#allocation2 + $0x360] sm:$0xf]
    %v181 = vld [vmem:[#allocation2 + $0x364] sm:$0xff]
    %v182 = vld [vmem:[#allocation2 + $0x36c] sm:$0xff]
    %v183 = vld [vmem:[#allocation2 + $0x374] sm:$0xff]
    %v184 = vld [vmem:[#allocation2 + $0x37c] sm:$0xf]
    %v185 = vld [vmem:[%s2] sm:$0xff]
    %v187 = vlaneseq
    %v188 = vshrl.u32 %v187, 7
    %v189 = vsub.s32 0, %v188
    %v190 = vrot.slane %v185, %v189
    %v191 = vlaneseq
    %v192 = vshrl.u32 %v191, 7
    %v193 = vsub.s32 1, %v192
    %v194 = vrot.slane %v185, %v193
    %v195 = vlaneseq
    %v196 = vshrl.u32 %v195, 7
    %v197 = vsub.s32 2, %v196
    %v198 = vrot.slane %v185, %v197
    %v199 = vlaneseq
    %v200 = vshrl.u32 %v199, 7
    %v201 = vsub.s32 3, %v200
    %v202 = vrot.slane %v185, %v201
    %v203 = vlaneseq
    %v204 = vshrl.u32 %v203, 7
    %v205 = vsub.s32 4, %v204
    %v206 = vrot.slane %v185, %v205
    %v207 = vlaneseq
    %v208 = vshrl.u32 %v207, 7
    %v209 = vsub.s32 5, %v208
    %v210 = vrot.slane %v185, %v209
    %v211 = vlaneseq
    %v212 = vshrl.u32 %v211, 7
    %v213 = vsub.s32 6, %v212
    %v214 = vrot.slane %v185, %v213
    %v350 = vunpack.c.l.b16 %v57
    %v351 = vunpack.c.h.b16 %v57
    %v352 = vunpack.c.l.b16 %v58
    %v353 = vunpack.c.h.b16 %v58
    %v354 = vunpack.c.l.b16 %v59
    %v355 = vunpack.c.h.b16 %v59
    %v356 = vunpack.c.l.b16 %v60
    %v357 = vunpack.c.l.b16 %v61
    %v358 = vunpack.c.h.b16 %v61
    %v359 = vunpack.c.l.b16 %v62
    %v360 = vunpack.c.h.b16 %v62
    %v361 = vunpack.c.l.b16 %v63
    %v362 = vunpack.c.h.b16 %v63
    %v363 = vunpack.c.l.b16 %v64
    %v364 = vunpack.c.l.b16 %v65
    %v365 = vunpack.c.h.b16 %v65
    %v366 = vunpack.c.l.b16 %v66
    %v367 = vunpack.c.h.b16 %v66
    %v368 = vunpack.c.l.b16 %v67
    %v369 = vunpack.c.h.b16 %v67
    %v370 = vunpack.c.l.b16 %v68
    %v371 = vunpack.c.l.b16 %v69
    %v372 = vunpack.c.h.b16 %v69
    %v373 = vunpack.c.l.b16 %v70
    %v374 = vunpack.c.h.b16 %v70
    %v375 = vunpack.c.l.b16 %v71
    %v376 = vunpack.c.h.b16 %v71
    %v377 = vunpack.c.l.b16 %v72
    %v378 = vunpack.c.l.b16 %v73
    %v379 = vunpack.c.h.b16 %v73
    %v380 = vunpack.c.l.b16 %v74
    %v381 = vunpack.c.h.b16 %v74
    %v382 = vunpack.c.l.b16 %v75
    %v383 = vunpack.c.h.b16 %v75
    %v384 = vunpack.c.l.b16 %v76
    %v385 = vunpack.c.l.b16 %v77
    %v386 = vunpack.c.h.b16 %v77
    %v387 = vunpack.c.l.b16 %v78
    %v388 = vunpack.c.h.b16 %v78
    %v389 = vunpack.c.l.b16 %v79
    %v390 = vunpack.c.h.b16 %v79
    %v391 = vunpack.c.l.b16 %v80
    %v392 = vunpack.c.l.b16 %v81
    %v393 = vunpack.c.h.b16 %v81
    %v394 = vunpack.c.l.b16 %v82
    %v395 = vunpack.c.h.b16 %v82
    %v396 = vunpack.c.l.b16 %v83
    %v397 = vunpack.c.h.b16 %v83
    %v398 = vunpack.c.l.b16 %v84
    %v399 = vunpack.c.l.b16 %v85
    %v400 = vunpack.c.h.b16 %v85
    %v401 = vunpack.c.l.b16 %v86
    %v402 = vunpack.c.h.b16 %v86
    %v403 = vunpack.c.l.b16 %v87
    %v404 = vunpack.c.h.b16 %v87
    %v405 = vunpack.c.l.b16 %v88
    %v406 = vunpack.c.l.b16 %v89
    %v407 = vunpack.c.h.b16 %v89
    %v408 = vunpack.c.l.b16 %v90
    %v409 = vunpack.c.h.b16 %v90
    %v410 = vunpack.c.l.b16 %v91
    %v411 = vunpack.c.h.b16 %v91
    %v412 = vunpack.c.l.b16 %v92
    %v413 = vunpack.c.l.b16 %v93
    %v414 = vunpack.c.h.b16 %v93
    %v415 = vunpack.c.l.b16 %v94
    %v416 = vunpack.c.h.b16 %v94
    %v417 = vunpack.c.l.b16 %v95
    %v418 = vunpack.c.h.b16 %v95
    %v419 = vunpack.c.l.b16 %v96
    %v420 = vunpack.c.l.b16 %v97
    %v421 = vunpack.c.h.b16 %v97
    %v422 = vunpack.c.l.b16 %v98
    %v423 = vunpack.c.h.b16 %v98
    %v424 = vunpack.c.l.b16 %v99
    %v425 = vunpack.c.h.b16 %v99
    %v426 = vunpack.c.l.b16 %v100
    %v427 = vunpack.c.l.b16 %v101
    %v428 = vunpack.c.h.b16 %v101
    %v429 = vunpack.c.l.b16 %v102
    %v430 = vunpack.c.h.b16 %v102
    %v431 = vunpack.c.l.b16 %v103
    %v432 = vunpack.c.h.b16 %v103
    %v433 = vunpack.c.l.b16 %v104
    %v434 = vunpack.c.l.b16 %v105
    %v435 = vunpack.c.h.b16 %v105
    %v436 = vunpack.c.l.b16 %v106
    %v437 = vunpack.c.h.b16 %v106
    %v438 = vunpack.c.l.b16 %v107
    %v439 = vunpack.c.h.b16 %v107
    %v440 = vunpack.c.l.b16 %v108
    %v441 = vunpack.c.l.b16 %v109
    %v442 = vunpack.c.h.b16 %v109
    %v443 = vunpack.c.l.b16 %v110
    %v444 = vunpack.c.h.b16 %v110
    %v445 = vunpack.c.l.b16 %v111
    %v446 = vunpack.c.h.b16 %v111
    %v447 = vunpack.c.l.b16 %v112
    %v448 = vunpack.c.l.b16 %v113
    %v449 = vunpack.c.h.b16 %v113
    %v450 = vunpack.c.l.b16 %v114
    %v451 = vunpack.c.h.b16 %v114
    %v452 = vunpack.c.l.b16 %v115
    %v453 = vunpack.c.h.b16 %v115
    %v454 = vunpack.c.l.b16 %v116
    %v455 = vunpack.c.l.b16 %v117
    %v456 = vunpack.c.h.b16 %v117
    %v457 = vunpack.c.l.b16 %v118
    %v458 = vunpack.c.h.b16 %v118
    %v459 = vunpack.c.l.b16 %v119
    %v460 = vunpack.c.h.b16 %v119
    %v461 = vunpack.c.l.b16 %v120
    %v462 = vunpack.c.l.b16 %v121
    %v463 = vunpack.c.h.b16 %v121
    %v464 = vunpack.c.l.b16 %v122
    %v465 = vunpack.c.h.b16 %v122
    %v466 = vunpack.c.l.b16 %v123
    %v467 = vunpack.c.h.b16 %v123
    %v468 = vunpack.c.l.b16 %v124
    %v469 = vunpack.c.l.b16 %v125
    %v470 = vunpack.c.h.b16 %v125
    %v471 = vunpack.c.l.b16 %v126
    %v472 = vunpack.c.h.b16 %v126
    %v473 = vunpack.c.l.b16 %v127
    %v474 = vunpack.c.h.b16 %v127
    %v475 = vunpack.c.l.b16 %v128
    %v476 = vunpack.c.l.b16 %v129
    %v477 = vunpack.c.h.b16 %v129
    %v478 = vunpack.c.l.b16 %v130
    %v479 = vunpack.c.h.b16 %v130
    %v480 = vunpack.c.l.b16 %v131
    %v481 = vunpack.c.h.b16 %v131
    %v482 = vunpack.c.l.b16 %v132
    %v483 = vunpack.c.l.b16 %v133
    %v484 = vunpack.c.h.b16 %v133
    %v485 = vunpack.c.l.b16 %v134
    %v486 = vunpack.c.h.b16 %v134
    %v487 = vunpack.c.l.b16 %v135
    %v488 = vunpack.c.h.b16 %v135
    %v489 = vunpack.c.l.b16 %v136
    %v490 = vunpack.c.l.b16 %v137
    %v491 = vunpack.c.h.b16 %v137
    %v492 = vunpack.c.l.b16 %v138
    %v493 = vunpack.c.h.b16 %v138
    %v494 = vunpack.c.l.b16 %v139
    %v495 = vunpack.c.h.b16 %v139
    %v496 = vunpack.c.l.b16 %v140
    %v497 = vunpack.c.l.b16 %v141
    %v498 = vunpack.c.h.b16 %v141
    %v499 = vunpack.c.l.b16 %v142
    %v500 = vunpack.c.h.b16 %v142
    %v501 = vunpack.c.l.b16 %v143
    %v502 = vunpack.c.h.b16 %v143
    %v503 = vunpack.c.l.b16 %v144
    %v504 = vunpack.c.l.b16 %v145
    %v505 = vunpack.c.h.b16 %v145
    %v506 = vunpack.c.l.b16 %v146
    %v507 = vunpack.c.h.b16 %v146
    %v508 = vunpack.c.l.b16 %v147
    %v509 = vunpack.c.h.b16 %v147
    %v510 = vunpack.c.l.b16 %v148
    %v511 = vunpack.c.l.b16 %v149
    %v512 = vunpack.c.h.b16 %v149
    %v513 = vunpack.c.l.b16 %v150
    %v514 = vunpack.c.h.b16 %v150
    %v515 = vunpack.c.l.b16 %v151
    %v516 = vunpack.c.h.b16 %v151
    %v517 = vunpack.c.l.b16 %v152
    %v518 = vunpack.c.l.b16 %v153
    %v519 = vunpack.c.h.b16 %v153
    %v520 = vunpack.c.l.b16 %v154
    %v521 = vunpack.c.h.b16 %v154
    %v522 = vunpack.c.l.b16 %v155
    %v523 = vunpack.c.h.b16 %v155
    %v524 = vunpack.c.l.b16 %v156
    %v525 = vunpack.c.l.b16 %v157
    %v526 = vunpack.c.h.b16 %v157
    %v527 = vunpack.c.l.b16 %v158
    %v528 = vunpack.c.h.b16 %v158
    %v529 = vunpack.c.l.b16 %v159
    %v530 = vunpack.c.h.b16 %v159
    %v531 = vunpack.c.l.b16 %v160
    %v532 = vunpack.c.l.b16 %v161
    %v533 = vunpack.c.h.b16 %v161
    %v534 = vunpack.c.l.b16 %v162
    %v535 = vunpack.c.h.b16 %v162
    %v536 = vunpack.c.l.b16 %v163
    %v537 = vunpack.c.h.b16 %v163
    %v538 = vunpack.c.l.b16 %v164
    %v539 = vunpack.c.l.b16 %v165
    %v540 = vunpack.c.h.b16 %v165
    %v541 = vunpack.c.l.b16 %v166
    %v542 = vunpack.c.h.b16 %v166
    %v543 = vunpack.c.l.b16 %v167
    %v544 = vunpack.c.h.b16 %v167
    %v545 = vunpack.c.l.b16 %v168
    %v546 = vunpack.c.l.b16 %v169
    %v547 = vunpack.c.h.b16 %v169
    %v548 = vunpack.c.l.b16 %v170
    %v549 = vunpack.c.h.b16 %v170
    %v550 = vunpack.c.l.b16 %v171
    %v551 = vunpack.c.h.b16 %v171
    %v552 = vunpack.c.l.b16 %v172
    %v553 = vunpack.c.l.b16 %v173
    %v554 = vunpack.c.h.b16 %v173
    %v555 = vunpack.c.l.b16 %v174
    %v556 = vunpack.c.h.b16 %v174
    %v557 = vunpack.c.l.b16 %v175
    %v558 = vunpack.c.h.b16 %v175
    %v559 = vunpack.c.l.b16 %v176
    %v560 = vunpack.c.l.b16 %v177
    %v561 = vunpack.c.h.b16 %v177
    %v562 = vunpack.c.l.b16 %v178
    %v563 = vunpack.c.h.b16 %v178
    %v564 = vunpack.c.l.b16 %v179
    %v565 = vunpack.c.h.b16 %v179
    %v566 = vunpack.c.l.b16 %v180
    %v567 = vunpack.c.l.b16 %v181
    %v568 = vunpack.c.h.b16 %v181
    %v569 = vunpack.c.l.b16 %v182
    %v570 = vunpack.c.h.b16 %v182
    %v571 = vunpack.c.l.b16 %v183
    %v572 = vunpack.c.h.b16 %v183
    %v573 = vunpack.c.l.b16 %v184
    %v574 = vpack.c.b16 %v357, %v350
    %v575 = vpack.c.b16 %v358, %v351
    %v576 = vpack.c.b16 %v359, %v352
    %v577 = vpack.c.b16 %v360, %v353
    %v578 = vpack.c.b16 %v361, %v354
    %v579 = vpack.c.b16 %v362, %v355
    %v580 = vpack.c.b16 %v363, %v356
    %v581 = vpack.c.b16 %v371, %v364
    %v582 = vpack.c.b16 %v372, %v365
    %v583 = vpack.c.b16 %v373, %v366
    %v584 = vpack.c.b16 %v374, %v367
    %v585 = vpack.c.b16 %v375, %v368
    %v586 = vpack.c.b16 %v376, %v369
    %v587 = vpack.c.b16 %v377, %v370
    %v588 = vpack.c.b16 %v385, %v378
    %v589 = vpack.c.b16 %v386, %v379
    %v590 = vpack.c.b16 %v387, %v380
    %v591 = vpack.c.b16 %v388, %v381
    %v592 = vpack.c.b16 %v389, %v382
    %v593 = vpack.c.b16 %v390, %v383
    %v594 = vpack.c.b16 %v391, %v384
    %v595 = vpack.c.b16 %v399, %v392
    %v596 = vpack.c.b16 %v400, %v393
    %v597 = vpack.c.b16 %v401, %v394
    %v598 = vpack.c.b16 %v402, %v395
    %v599 = vpack.c.b16 %v403, %v396
    %v600 = vpack.c.b16 %v404, %v397
    %v601 = vpack.c.b16 %v405, %v398
    %v602 = vpack.c.b16 %v413, %v406
    %v603 = vpack.c.b16 %v414, %v407
    %v604 = vpack.c.b16 %v415, %v408
    %v605 = vpack.c.b16 %v416, %v409
    %v606 = vpack.c.b16 %v417, %v410
    %v607 = vpack.c.b16 %v418, %v411
    %v608 = vpack.c.b16 %v419, %v412
    %v609 = vpack.c.b16 %v427, %v420
    %v610 = vpack.c.b16 %v428, %v421
    %v611 = vpack.c.b16 %v429, %v422
    %v612 = vpack.c.b16 %v430, %v423
    %v613 = vpack.c.b16 %v431, %v424
    %v614 = vpack.c.b16 %v432, %v425
    %v615 = vpack.c.b16 %v433, %v426
    %v616 = vpack.c.b16 %v441, %v434
    %v617 = vpack.c.b16 %v442, %v435
    %v618 = vpack.c.b16 %v443, %v436
    %v619 = vpack.c.b16 %v444, %v437
    %v620 = vpack.c.b16 %v445, %v438
    %v621 = vpack.c.b16 %v446, %v439
    %v622 = vpack.c.b16 %v447, %v440
    %v623 = vpack.c.b16 %v455, %v448
    %v624 = vpack.c.b16 %v456, %v449
    %v625 = vpack.c.b16 %v457, %v450
    %v626 = vpack.c.b16 %v458, %v451
    %v627 = vpack.c.b16 %v459, %v452
    %v628 = vpack.c.b16 %v460, %v453
    %v629 = vpack.c.b16 %v461, %v454
    %v630 = vpack.c.b16 %v469, %v462
    %v631 = vpack.c.b16 %v470, %v463
    %v632 = vpack.c.b16 %v471, %v464
    %v633 = vpack.c.b16 %v472, %v465
    %v634 = vpack.c.b16 %v473, %v466
    %v635 = vpack.c.b16 %v474, %v467
    %v636 = vpack.c.b16 %v475, %v468
    %v637 = vpack.c.b16 %v483, %v476
    %v638 = vpack.c.b16 %v484, %v477
    %v639 = vpack.c.b16 %v485, %v478
    %v640 = vpack.c.b16 %v486, %v479
    %v641 = vpack.c.b16 %v487, %v480
    %v642 = vpack.c.b16 %v488, %v481
    %v643 = vpack.c.b16 %v489, %v482
    %v644 = vpack.c.b16 %v497, %v490
    %v645 = vpack.c.b16 %v498, %v491
    %v646 = vpack.c.b16 %v499, %v492
    %v647 = vpack.c.b16 %v500, %v493
    %v648 = vpack.c.b16 %v501, %v494
    %v649 = vpack.c.b16 %v502, %v495
    %v650 = vpack.c.b16 %v503, %v496
    %v651 = vpack.c.b16 %v511, %v504
    %v652 = vpack.c.b16 %v512, %v505
    %v653 = vpack.c.b16 %v513, %v506
    %v654 = vpack.c.b16 %v514, %v507
    %v655 = vpack.c.b16 %v515, %v508
    %v656 = vpack.c.b16 %v516, %v509
    %v657 = vpack.c.b16 %v517, %v510
    %v658 = vpack.c.b16 %v525, %v518
    %v659 = vpack.c.b16 %v526, %v519
    %v660 = vpack.c.b16 %v527, %v520
    %v661 = vpack.c.b16 %v528, %v521
    %v662 = vpack.c.b16 %v529, %v522
    %v663 = vpack.c.b16 %v530, %v523
    %v664 = vpack.c.b16 %v531, %v524
    %v665 = vpack.c.b16 %v539, %v532
    %v666 = vpack.c.b16 %v540, %v533
    %v667 = vpack.c.b16 %v541, %v534
    %v668 = vpack.c.b16 %v542, %v535
    %v669 = vpack.c.b16 %v543, %v536
    %v670 = vpack.c.b16 %v544, %v537
    %v671 = vpack.c.b16 %v545, %v538
    %v672 = vpack.c.b16 %v553, %v546
    %v673 = vpack.c.b16 %v554, %v547
    %v674 = vpack.c.b16 %v555, %v548
    %v675 = vpack.c.b16 %v556, %v549
    %v676 = vpack.c.b16 %v557, %v550
    %v677 = vpack.c.b16 %v558, %v551
    %v678 = vpack.c.b16 %v559, %v552
    %v679 = vpack.c.b16 %v567, %v560
    %v680 = vpack.c.b16 %v568, %v561
    %v681 = vpack.c.b16 %v569, %v562
    %v682 = vpack.c.b16 %v570, %v563
    %v683 = vpack.c.b16 %v571, %v564
    %v684 = vpack.c.b16 %v572, %v565
    %v685 = vpack.c.b16 %v573, %v566
    %798 = vmatprep.subr.bf16.mxu0 %v575
    %799 = vmatpush1.bf16.msra.mxu0 %v574
    %800 = vmatprep.subr.bf16.mxu0 %v582
    %801 = vmatpush1.bf16.msra.mxu0 %v581
    %802 = vmatprep.subr.bf16.mxu0 %v589
    %803 = vmatpush1.bf16.msra.mxu0 %v588
    %804 = vmatprep.subr.bf16.mxu0 %v596
    %805 = vmatpush1.bf16.msra.mxu0 %v595
    %806 = vmatprep.subr.bf16.mxu0 %v603
    %807 = vmatpush1.bf16.msra.mxu0 %v602
    %808 = vmatprep.subr.bf16.mxu0 %v610
    %809 = vmatpush1.bf16.msra.mxu0 %v609
    %810 = vmatprep.subr.bf16.mxu0 %v617
    %811 = vmatpush1.bf16.msra.mxu0 %v616
    %812 = vmatprep.subr.bf16.mxu0 %v624
    %813 = vmatpush1.bf16.msra.mxu0 %v623
    %814 = vmatprep.subr.bf16.mxu0 %v631
    %815 = vmatpush1.bf16.msra.mxu0 %v630
    %816 = vmatprep.subr.bf16.mxu0 %v638
    %817 = vmatpush1.bf16.msra.mxu0 %v637
    %818 = vmatprep.subr.bf16.mxu0 %v645
    %819 = vmatpush1.bf16.msra.mxu0 %v644
    %820 = vmatprep.subr.bf16.mxu0 %v652
    %821 = vmatpush1.bf16.msra.mxu0 %v651
    %822 = vmatprep.subr.bf16.mxu0 %v659
    %823 = vmatpush1.bf16.msra.mxu0 %v658
    %824 = vmatprep.subr.bf16.mxu0 %v666
    %825 = vmatpush1.bf16.msra.mxu0 %v665
    %826 = vmatprep.subr.bf16.mxu0 %v673
    %827 = vmatpush1.bf16.msra.mxu0 %v672
    %828 = vmatprep.subr.bf16.mxu0 %v680
    %829 = vmatpush1.bf16.msra.mxu0 %v679
    %830 = vmatprep.mubr.bf16.mxu0 %v56
    %831 = vmatmul.mubr.bf16.gmra.mrb[0].mxu0 %v55
    %v832 = vpop.f32.mrb[0].mxu0
    %v833 = vadd.f32 %v190, %v832
    %v834 = vpop.f32.mrb[0].mxu0
    %v835 = vadd.f32 %v194, %v834
    %v836 = vpop.f32.mrb[0].mxu0
    %v837 = vpop.f32.mrb[0].mxu0
    %838 = vdwg.mxu0
    %839 = vmatprep.subr.bf16.mxu0 %v577
    %840 = vmatpush1.bf16.msra.mxu0 %v576
    %841 = vmatprep.subr.bf16.mxu0 %v584
    %842 = vmatpush1.bf16.msra.mxu0 %v583
    %843 = vmatprep.subr.bf16.mxu0 %v591
    %844 = vmatpush1.bf16.msra.mxu0 %v590
    %845 = vmatprep.subr.bf16.mxu0 %v598
    %846 = vmatpush1.bf16.msra.mxu0 %v597
    %847 = vmatprep.subr.bf16.mxu0 %v605
    %848 = vmatpush1.bf16.msra.mxu0 %v604
    %849 = vmatprep.subr.bf16.mxu0 %v612
    %850 = vmatpush1.bf16.msra.mxu0 %v611
    %851 = vmatprep.subr.bf16.mxu0 %v619
    %852 = vmatpush1.bf16.msra.mxu0 %v618
    %853 = vmatprep.subr.bf16.mxu0 %v626
    %854 = vmatpush1.bf16.msra.mxu0 %v625
    %855 = vmatprep.subr.bf16.mxu0 %v633
    %856 = vmatpush1.bf16.msra.mxu0 %v632
    %857 = vmatprep.subr.bf16.mxu0 %v640
    %858 = vmatpush1.bf16.msra.mxu0 %v639
    %859 = vmatprep.subr.bf16.mxu0 %v647
    %860 = vmatpush1.bf16.msra.mxu0 %v646
    %861 = vmatprep.subr.bf16.mxu0 %v654
    %862 = vmatpush1.bf16.msra.mxu0 %v653
    %863 = vmatprep.subr.bf16.mxu0 %v661
    %864 = vmatpush1.bf16.msra.mxu0 %v660
    %865 = vmatprep.subr.bf16.mxu0 %v668
    %866 = vmatpush1.bf16.msra.mxu0 %v667
    %867 = vmatprep.subr.bf16.mxu0 %v675
    %868 = vmatpush1.bf16.msra.mxu0 %v674
    %869 = vmatprep.subr.bf16.mxu0 %v682
    %870 = vmatpush1.bf16.msra.mxu0 %v681
    %871 = vmatprep.mubr.bf16.mxu0 %v56
    %872 = vmatmul.mubr.bf16.gmra.mrb[0].mxu0 %v55
    %v873 = vpop.f32.mrb[0].mxu0
    %v874 = vadd.f32 %v198, %v873
    %v875 = vpop.f32.mrb[0].mxu0
    %v876 = vadd.f32 %v202, %v875
    %v877 = vpop.f32.mrb[0].mxu0
    %v878 = vpop.f32.mrb[0].mxu0
    %879 = vdwg.mxu0
    %880 = vmatprep.subr.bf16.mxu0 %v579
    %881 = vmatpush1.bf16.msra.mxu0 %v578
    %882 = vmatprep.subr.bf16.mxu0 %v586
    %883 = vmatpush1.bf16.msra.mxu0 %v585
    %884 = vmatprep.subr.bf16.mxu0 %v593
    %885 = vmatpush1.bf16.msra.mxu0 %v592
    %886 = vmatprep.subr.bf16.mxu0 %v600
    %887 = vmatpush1.bf16.msra.mxu0 %v599
    %888 = vmatprep.subr.bf16.mxu0 %v607
    %889 = vmatpush1.bf16.msra.mxu0 %v606
    %890 = vmatprep.subr.bf16.mxu0 %v614
    %891 = vmatpush1.bf16.msra.mxu0 %v613
    %892 = vmatprep.subr.bf16.mxu0 %v621
    %893 = vmatpush1.bf16.msra.mxu0 %v620
    %894 = vmatprep.subr.bf16.mxu0 %v628
    %895 = vmatpush1.bf16.msra.mxu0 %v627
    %896 = vmatprep.subr.bf16.mxu0 %v635
    %897 = vmatpush1.bf16.msra.mxu0 %v634
    %898 = vmatprep.subr.bf16.mxu0 %v642
    %899 = vmatpush1.bf16.msra.mxu0 %v641
    %900 = vmatprep.subr.bf16.mxu0 %v649
    %901 = vmatpush1.bf16.msra.mxu0 %v648
    %902 = vmatprep.subr.bf16.mxu0 %v656
    %903 = vmatpush1.bf16.msra.mxu0 %v655
    %904 = vmatprep.subr.bf16.mxu0 %v663
    %905 = vmatpush1.bf16.msra.mxu0 %v662
    %906 = vmatprep.subr.bf16.mxu0 %v670
    %907 = vmatpush1.bf16.msra.mxu0 %v669
    %908 = vmatprep.subr.bf16.mxu0 %v677
    %909 = vmatpush1.bf16.msra.mxu0 %v676
    %910 = vmatprep.subr.bf16.mxu0 %v684
    %911 = vmatpush1.bf16.msra.mxu0 %v683
    %912 = vmatprep.mubr.bf16.mxu0 %v56
    %913 = vmatmul.mubr.bf16.gmra.mrb[0].mxu0 %v55
    %v914 = vpop.f32.mrb[0].mxu0
    %v915 = vadd.f32 %v206, %v914
    %v916 = vpop.f32.mrb[0].mxu0
    %v917 = vadd.f32 %v210, %v916
    %v918 = vpop.f32.mrb[0].mxu0
    %v919 = vpop.f32.mrb[0].mxu0
    %920 = vdwg.mxu0
    %921 = vmatprep.subr.bf16.mxu0 0
    %922 = vmatpush1.bf16.msra.mxu0 %v580
    %923 = vmatprep.subr.bf16.mxu0 0
    %924 = vmatpush1.bf16.msra.mxu0 %v587
    %925 = vmatprep.subr.bf16.mxu0 0
    %926 = vmatpush1.bf16.msra.mxu0 %v594
    %927 = vmatprep.subr.bf16.mxu0 0
    %928 = vmatpush1.bf16.msra.mxu0 %v601
    %929 = vmatprep.subr.bf16.mxu0 0
    %930 = vmatpush1.bf16.msra.mxu0 %v608
    %931 = vmatprep.subr.bf16.mxu0 0
    %932 = vmatpush1.bf16.msra.mxu0 %v615
    %933 = vmatprep.subr.bf16.mxu0 0
    %934 = vmatpush1.bf16.msra.mxu0 %v622
    %935 = vmatprep.subr.bf16.mxu0 0
    %936 = vmatpush1.bf16.msra.mxu0 %v629
    %937 = vmatprep.subr.bf16.mxu0 0
    %938 = vmatpush1.bf16.msra.mxu0 %v636
    %939 = vmatprep.subr.bf16.mxu0 0
    %940 = vmatpush1.bf16.msra.mxu0 %v643
    %941 = vmatprep.subr.bf16.mxu0 0
    %942 = vmatpush1.bf16.msra.mxu0 %v650
    %943 = vmatprep.subr.bf16.mxu0 0
    %944 = vmatpush1.bf16.msra.mxu0 %v657
    %945 = vmatprep.subr.bf16.mxu0 0
    %946 = vmatpush1.bf16.msra.mxu0 %v664
    %947 = vmatprep.subr.bf16.mxu0 0
    %948 = vmatpush1.bf16.msra.mxu0 %v671
    %949 = vmatprep.subr.bf16.mxu0 0
    %950 = vmatpush1.bf16.msra.mxu0 %v678
    %951 = vmatprep.subr.bf16.mxu0 0
    %952 = vmatpush1.bf16.msra.mxu0 %v685
    %953 = vmatprep.mubr.bf16.mxu0 %v56
    %954 = vmatmul.mubr.bf16.gmra.mrb[0].mxu0 %v55
    %v955 = vpop.f32.mrb[0].mxu0
    %v956 = vadd.f32 %v214, %v955
    %v957 = vpop.f32.mrb[0].mxu0
    %v958 = vpop.f32.mrb[0].mxu0
    %v959 = vpop.f32.mrb[0].mxu0
    %960 = vdwg.mxu0
    %vm961 = vcmp.gt.f32.partialorder %v833, 0.0
    %vm962 = vcmp.gt.f32.partialorder %v835, 0.0
    %vm963 = vcmp.gt.f32.partialorder %v874, 0.0
    %vm964 = vcmp.gt.f32.partialorder %v876, 0.0
    %vm965 = vcmp.gt.f32.partialorder %v915, 0.0
    %vm966 = vcmp.gt.f32.partialorder %v917, 0.0
    %vm967 = vcmp.gt.f32.partialorder %v956, 0.0
    %v968 = vmul.f32 %v833, 0.01
    %v969 = vmul.f32 %v835, 0.01
    %v970 = vmul.f32 %v874, 0.01
    %v971 = vmul.f32 %v876, 0.01
    %v972 = vmul.f32 %v915, 0.01
    %v973 = vmul.f32 %v917, 0.01
    %v974 = vmul.f32 %v956, 0.01
    %v975 = vsel %vm961, %v833, %v968
    %v976 = vsel %vm962, %v835, %v969
    %v977 = vsel %vm963, %v874, %v970
    %v978 = vsel %vm964, %v876, %v971
    %v979 = vsel %vm965, %v915, %v972
    %v980 = vsel %vm966, %v917, %v973
    %v981 = vsel %vm967, %v956, %v974
    %v982 = vpack.c.bf16 %v975, %v975
    %v983 = vpack.c.bf16 %v976, %v976
    %v984 = vpack.c.bf16 %v977, %v977
    %v985 = vpack.c.bf16 %v978, %v978
    %v986 = vpack.c.bf16 %v979, %v979
    %v987 = vpack.c.bf16 %v980, %v980
    %v988 = vpack.c.bf16 %v981, %v981
    %v989 = vld [vmem:[%s3] sm:$0xf]
    %v990 = vld [vmem:[%s3 + $0x4] sm:$0xf]
    %v991 = vld [vmem:[%s3 + $0x8] sm:$0xf]
    %v992 = vld [vmem:[%s3 + $0xc] sm:$0xf]
    %v993 = vld [vmem:[%s3 + $0x10] sm:$0xf]
    %v994 = vld [vmem:[%s3 + $0x14] sm:$0xf]
    %v995 = vld [vmem:[%s3 + $0x18] sm:$0xf]
    %v996 = vld [vmem:[%s3 + $0x1c] sm:$0xf]
    %v997 = vld [vmem:[%s3 + $0x20] sm:$0xf]
    %v998 = vld [vmem:[%s3 + $0x24] sm:$0xf]
    %v999 = vld [vmem:[%s3 + $0x28] sm:$0xf]
    %v1000 = vld [vmem:[%s3 + $0x2c] sm:$0xf]
    %v1001 = vld [vmem:[%s3 + $0x30] sm:$0xf]
    %v1002 = vld [vmem:[%s3 + $0x34] sm:$0xf]
    %v1003 = vld [vmem:[%s3 + $0x38] sm:$0xf]
    %v1004 = vld [vmem:[%s3 + $0x3c] sm:$0xf]
    %v1005 = vld [vmem:[%s3 + $0x40] sm:$0xf]
    %v1006 = vld [vmem:[%s3 + $0x44] sm:$0xf]
    %v1007 = vld [vmem:[%s3 + $0x48] sm:$0xf]
    %v1008 = vld [vmem:[%s3 + $0x4c] sm:$0xf]
    %v1009 = vld [vmem:[%s3 + $0x50] sm:$0xf]
    %v1010 = vld [vmem:[%s3 + $0x54] sm:$0xf]
    %v1011 = vld [vmem:[%s3 + $0x58] sm:$0xf]
    %v1012 = vld [vmem:[%s3 + $0x5c] sm:$0xf]
    %v1013 = vld [vmem:[%s3 + $0x60] sm:$0xf]
    %v1014 = vld [vmem:[%s3 + $0x64] sm:$0xf]
    %v1015 = vld [vmem:[%s3 + $0x68] sm:$0xf]
    %v1016 = vld [vmem:[%s3 + $0x6c] sm:$0xf]
    %v1017 = vld [vmem:[%s3 + $0x70] sm:$0xf]
    %v1018 = vld [vmem:[%s3 + $0x74] sm:$0xf]
    %v1019 = vld [vmem:[%s3 + $0x78] sm:$0xf]
    %v1020 = vld [vmem:[%s3 + $0x7c] sm:$0xf]
    %v1021 = vld [vmem:[%s3 + $0x80] sm:$0xf]
    %v1022 = vld [vmem:[%s3 + $0x84] sm:$0xf]
    %v1023 = vld [vmem:[%s3 + $0x88] sm:$0xf]
    %v1024 = vld [vmem:[%s3 + $0x8c] sm:$0xf]
    %v1025 = vld [vmem:[%s3 + $0x90] sm:$0xf]
    %v1026 = vld [vmem:[%s3 + $0x94] sm:$0xf]
    %v1027 = vld [vmem:[%s3 + $0x98] sm:$0xf]
    %v1028 = vld [vmem:[%s3 + $0x9c] sm:$0xf]
    %v1029 = vld [vmem:[%s3 + $0xa0] sm:$0xf]
    %v1030 = vld [vmem:[%s3 + $0xa4] sm:$0xf]
    %v1031 = vld [vmem:[%s3 + $0xa8] sm:$0xf]
    %v1032 = vld [vmem:[%s3 + $0xac] sm:$0xf]
    %v1033 = vld [vmem:[%s3 + $0xb0] sm:$0xf]
    %v1034 = vld [vmem:[%s3 + $0xb4] sm:$0xf]
    %v1035 = vld [vmem:[%s3 + $0xb8] sm:$0xf]
    %v1036 = vld [vmem:[%s3 + $0xbc] sm:$0xf]
    %v1037 = vld [vmem:[%s3 + $0xc0] sm:$0xf]
    %v1038 = vld [vmem:[%s3 + $0xc4] sm:$0xf]
    %v1039 = vld [vmem:[%s3 + $0xc8] sm:$0xf]
    %v1040 = vld [vmem:[%s3 + $0xcc] sm:$0xf]
    %v1041 = vld [vmem:[%s3 + $0xd0] sm:$0xf]
    %v1042 = vld [vmem:[%s3 + $0xd4] sm:$0xf]
    %v1043 = vld [vmem:[%s3 + $0xd8] sm:$0xf]
    %v1044 = vld [vmem:[%s3 + $0xdc] sm:$0xf]
    %v1045 = vld [vmem:[%s3 + $0xe0] sm:$0xf]
    %v1046 = vld [vmem:[%s3 + $0xe4] sm:$0xf]
    %v1047 = vld [vmem:[%s3 + $0xe8] sm:$0xf]
    %v1048 = vld [vmem:[%s3 + $0xec] sm:$0xf]
    %v1049 = vld [vmem:[%s3 + $0xf0] sm:$0xf]
    %v1050 = vld [vmem:[%s3 + $0xf4] sm:$0xf]
    %v1051 = vld [vmem:[%s3 + $0xf8] sm:$0xf]
    %v1052 = vld [vmem:[%s3 + $0xfc] sm:$0xf]
    %v1053 = vld [vmem:[%s3 + $0x100] sm:$0xf]
    %v1054 = vld [vmem:[%s3 + $0x104] sm:$0xf]
    %v1055 = vld [vmem:[%s3 + $0x108] sm:$0xf]
    %v1056 = vld [vmem:[%s3 + $0x10c] sm:$0xf]
    %v1057 = vld [vmem:[%s3 + $0x110] sm:$0xf]
    %v1058 = vld [vmem:[%s3 + $0x114] sm:$0xf]
    %v1059 = vld [vmem:[%s3 + $0x118] sm:$0xf]
    %v1060 = vld [vmem:[%s3 + $0x11c] sm:$0xf]
    %v1061 = vld [vmem:[%s3 + $0x120] sm:$0xf]
    %v1062 = vld [vmem:[%s3 + $0x124] sm:$0xf]
    %v1063 = vld [vmem:[%s3 + $0x128] sm:$0xf]
    %v1064 = vld [vmem:[%s3 + $0x12c] sm:$0xf]
    %v1065 = vld [vmem:[%s3 + $0x130] sm:$0xf]
    %v1066 = vld [vmem:[%s3 + $0x134] sm:$0xf]
    %v1067 = vld [vmem:[%s3 + $0x138] sm:$0xf]
    %v1068 = vld [vmem:[%s3 + $0x13c] sm:$0xf]
    %v1069 = vld [vmem:[%s3 + $0x140] sm:$0xf]
    %v1070 = vld [vmem:[%s3 + $0x144] sm:$0xf]
    %v1071 = vld [vmem:[%s3 + $0x148] sm:$0xf]
    %v1072 = vld [vmem:[%s3 + $0x14c] sm:$0xf]
    %v1073 = vld [vmem:[%s3 + $0x150] sm:$0xf]
    %v1074 = vld [vmem:[%s3 + $0x154] sm:$0xf]
    %v1075 = vld [vmem:[%s3 + $0x158] sm:$0xf]
    %v1076 = vld [vmem:[%s3 + $0x15c] sm:$0xf]
    %v1077 = vld [vmem:[%s3 + $0x160] sm:$0xf]
    %v1078 = vld [vmem:[%s3 + $0x164] sm:$0xf]
    %v1079 = vld [vmem:[%s3 + $0x168] sm:$0xf]
    %v1080 = vld [vmem:[%s3 + $0x16c] sm:$0xf]
    %v1081 = vld [vmem:[%s3 + $0x170] sm:$0xf]
    %v1082 = vld [vmem:[%s3 + $0x174] sm:$0xf]
    %v1083 = vld [vmem:[%s3 + $0x178] sm:$0xf]
    %v1084 = vld [vmem:[%s3 + $0x17c] sm:$0xf]
    %v1085 = vld [vmem:[%s3 + $0x180] sm:$0xf]
    %v1086 = vld [vmem:[%s3 + $0x184] sm:$0xf]
    %v1087 = vld [vmem:[%s3 + $0x188] sm:$0xf]
    %v1088 = vld [vmem:[%s3 + $0x18c] sm:$0xf]
    %v1089 = vld [vmem:[%s3 + $0x190] sm:$0xf]
    %v1090 = vld [vmem:[%s3 + $0x194] sm:$0xf]
    %v1091 = vld [vmem:[%s3 + $0x198] sm:$0xf]
    %v1092 = vld [vmem:[%s3 + $0x19c] sm:$0xf]
    %v1093 = vld [vmem:[%s3 + $0x1a0] sm:$0xf]
    %v1094 = vld [vmem:[%s3 + $0x1a4] sm:$0xf]
    %v1095 = vld [vmem:[%s3 + $0x1a8] sm:$0xf]
    %v1096 = vld [vmem:[%s3 + $0x1ac] sm:$0xf]
    %v1097 = vld [vmem:[%s3 + $0x1b0] sm:$0xf]
    %v1098 = vld [vmem:[%s3 + $0x1b4] sm:$0xf]
    %v1099 = vld [vmem:[%s3 + $0x1b8] sm:$0xf]
    %v1100 = vld [vmem:[%s3 + $0x1bc] sm:$0xf]
    %v1101 = vld [vmem:[%s4] sm:$0x1]
    %v1103 = vlaneseq
    %v1104 = vshrl.u32 %v1103, 7
    %v1105 = vsub.s32 0, %v1104
    %v1106 = vrot.slane %v1101, %v1105
    %v1220 = vunpack.c.l.b16 %v989
    %v1221 = vunpack.c.l.b16 %v990
    %v1222 = vunpack.c.l.b16 %v991
    %v1223 = vunpack.c.l.b16 %v992
    %v1224 = vunpack.c.l.b16 %v993
    %v1225 = vunpack.c.l.b16 %v994
    %v1226 = vunpack.c.l.b16 %v995
    %v1227 = vunpack.c.l.b16 %v996
    %v1228 = vunpack.c.l.b16 %v997
    %v1229 = vunpack.c.l.b16 %v998
    %v1230 = vunpack.c.l.b16 %v999
    %v1231 = vunpack.c.l.b16 %v1000
    %v1232 = vunpack.c.l.b16 %v1001
    %v1233 = vunpack.c.l.b16 %v1002
    %v1234 = vunpack.c.l.b16 %v1003
    %v1235 = vunpack.c.l.b16 %v1004
    %v1236 = vunpack.c.l.b16 %v1005
    %v1237 = vunpack.c.l.b16 %v1006
    %v1238 = vunpack.c.l.b16 %v1007
    %v1239 = vunpack.c.l.b16 %v1008
    %v1240 = vunpack.c.l.b16 %v1009
    %v1241 = vunpack.c.l.b16 %v1010
    %v1242 = vunpack.c.l.b16 %v1011
    %v1243 = vunpack.c.l.b16 %v1012
    %v1244 = vunpack.c.l.b16 %v1013
    %v1245 = vunpack.c.l.b16 %v1014
    %v1246 = vunpack.c.l.b16 %v1015
    %v1247 = vunpack.c.l.b16 %v1016
    %v1248 = vunpack.c.l.b16 %v1017
    %v1249 = vunpack.c.l.b16 %v1018
    %v1250 = vunpack.c.l.b16 %v1019
    %v1251 = vunpack.c.l.b16 %v1020
    %v1252 = vunpack.c.l.b16 %v1021
    %v1253 = vunpack.c.l.b16 %v1022
    %v1254 = vunpack.c.l.b16 %v1023
    %v1255 = vunpack.c.l.b16 %v1024
    %v1256 = vunpack.c.l.b16 %v1025
    %v1257 = vunpack.c.l.b16 %v1026
    %v1258 = vunpack.c.l.b16 %v1027
    %v1259 = vunpack.c.l.b16 %v1028
    %v1260 = vunpack.c.l.b16 %v1029
    %v1261 = vunpack.c.l.b16 %v1030
    %v1262 = vunpack.c.l.b16 %v1031
    %v1263 = vunpack.c.l.b16 %v1032
    %v1264 = vunpack.c.l.b16 %v1033
    %v1265 = vunpack.c.l.b16 %v1034
    %v1266 = vunpack.c.l.b16 %v1035
    %v1267 = vunpack.c.l.b16 %v1036
    %v1268 = vunpack.c.l.b16 %v1037
    %v1269 = vunpack.c.l.b16 %v1038
    %v1270 = vunpack.c.l.b16 %v1039
    %v1271 = vunpack.c.l.b16 %v1040
    %v1272 = vunpack.c.l.b16 %v1041
    %v1273 = vunpack.c.l.b16 %v1042
    %v1274 = vunpack.c.l.b16 %v1043
    %v1275 = vunpack.c.l.b16 %v1044
    %v1276 = vunpack.c.l.b16 %v1045
    %v1277 = vunpack.c.l.b16 %v1046
    %v1278 = vunpack.c.l.b16 %v1047
    %v1279 = vunpack.c.l.b16 %v1048
    %v1280 = vunpack.c.l.b16 %v1049
    %v1281 = vunpack.c.l.b16 %v1050
    %v1282 = vunpack.c.l.b16 %v1051
    %v1283 = vunpack.c.l.b16 %v1052
    %v1284 = vunpack.c.l.b16 %v1053
    %v1285 = vunpack.c.l.b16 %v1054
    %v1286 = vunpack.c.l.b16 %v1055
    %v1287 = vunpack.c.l.b16 %v1056
    %v1288 = vunpack.c.l.b16 %v1057
    %v1289 = vunpack.c.l.b16 %v1058
    %v1290 = vunpack.c.l.b16 %v1059
    %v1291 = vunpack.c.l.b16 %v1060
    %v1292 = vunpack.c.l.b16 %v1061
    %v1293 = vunpack.c.l.b16 %v1062
    %v1294 = vunpack.c.l.b16 %v1063
    %v1295 = vunpack.c.l.b16 %v1064
    %v1296 = vunpack.c.l.b16 %v1065
    %v1297 = vunpack.c.l.b16 %v1066
    %v1298 = vunpack.c.l.b16 %v1067
    %v1299 = vunpack.c.l.b16 %v1068
    %v1300 = vunpack.c.l.b16 %v1069
    %v1301 = vunpack.c.l.b16 %v1070
    %v1302 = vunpack.c.l.b16 %v1071
    %v1303 = vunpack.c.l.b16 %v1072
    %v1304 = vunpack.c.l.b16 %v1073
    %v1305 = vunpack.c.l.b16 %v1074
    %v1306 = vunpack.c.l.b16 %v1075
    %v1307 = vunpack.c.l.b16 %v1076
    %v1308 = vunpack.c.l.b16 %v1077
    %v1309 = vunpack.c.l.b16 %v1078
    %v1310 = vunpack.c.l.b16 %v1079
    %v1311 = vunpack.c.l.b16 %v1080
    %v1312 = vunpack.c.l.b16 %v1081
    %v1313 = vunpack.c.l.b16 %v1082
    %v1314 = vunpack.c.l.b16 %v1083
    %v1315 = vunpack.c.l.b16 %v1084
    %v1316 = vunpack.c.l.b16 %v1085
    %v1317 = vunpack.c.l.b16 %v1086
    %v1318 = vunpack.c.l.b16 %v1087
    %v1319 = vunpack.c.l.b16 %v1088
    %v1320 = vunpack.c.l.b16 %v1089
    %v1321 = vunpack.c.l.b16 %v1090
    %v1322 = vunpack.c.l.b16 %v1091
    %v1323 = vunpack.c.l.b16 %v1092
    %v1324 = vunpack.c.l.b16 %v1093
    %v1325 = vunpack.c.l.b16 %v1094
    %v1326 = vunpack.c.l.b16 %v1095
    %v1327 = vunpack.c.l.b16 %v1096
    %v1328 = vunpack.c.l.b16 %v1097
    %v1329 = vunpack.c.l.b16 %v1098
    %v1330 = vunpack.c.l.b16 %v1099
    %v1331 = vunpack.c.l.b16 %v1100
    %v1332 = vpack.c.b16 %v1221, %v1220
    %v1333 = vpack.c.b16 %v1223, %v1222
    %v1334 = vpack.c.b16 %v1225, %v1224
    %v1335 = vpack.c.b16 %v1227, %v1226
    %v1336 = vpack.c.b16 %v1229, %v1228
    %v1337 = vpack.c.b16 %v1231, %v1230
    %v1338 = vpack.c.b16 %v1233, %v1232
    %v1339 = vpack.c.b16 %v1235, %v1234
    %v1340 = vpack.c.b16 %v1237, %v1236
    %v1341 = vpack.c.b16 %v1239, %v1238
    %v1342 = vpack.c.b16 %v1241, %v1240
    %v1343 = vpack.c.b16 %v1243, %v1242
    %v1344 = vpack.c.b16 %v1245, %v1244
    %v1345 = vpack.c.b16 %v1247, %v1246
    %v1346 = vpack.c.b16 %v1249, %v1248
    %v1347 = vpack.c.b16 %v1251, %v1250
    %v1348 = vpack.c.b16 %v1253, %v1252
    %v1349 = vpack.c.b16 %v1255, %v1254
    %v1350 = vpack.c.b16 %v1257, %v1256
    %v1351 = vpack.c.b16 %v1259, %v1258
    %v1352 = vpack.c.b16 %v1261, %v1260
    %v1353 = vpack.c.b16 %v1263, %v1262
    %v1354 = vpack.c.b16 %v1265, %v1264
    %v1355 = vpack.c.b16 %v1267, %v1266
    %v1356 = vpack.c.b16 %v1269, %v1268
    %v1357 = vpack.c.b16 %v1271, %v1270
    %v1358 = vpack.c.b16 %v1273, %v1272
    %v1359 = vpack.c.b16 %v1275, %v1274
    %v1360 = vpack.c.b16 %v1277, %v1276
    %v1361 = vpack.c.b16 %v1279, %v1278
    %v1362 = vpack.c.b16 %v1281, %v1280
    %v1363 = vpack.c.b16 %v1283, %v1282
    %v1364 = vpack.c.b16 %v1285, %v1284
    %v1365 = vpack.c.b16 %v1287, %v1286
    %v1366 = vpack.c.b16 %v1289, %v1288
    %v1367 = vpack.c.b16 %v1291, %v1290
    %v1368 = vpack.c.b16 %v1293, %v1292
    %v1369 = vpack.c.b16 %v1295, %v1294
    %v1370 = vpack.c.b16 %v1297, %v1296
    %v1371 = vpack.c.b16 %v1299, %v1298
    %v1372 = vpack.c.b16 %v1301, %v1300
    %v1373 = vpack.c.b16 %v1303, %v1302
    %v1374 = vpack.c.b16 %v1305, %v1304
    %v1375 = vpack.c.b16 %v1307, %v1306
    %v1376 = vpack.c.b16 %v1309, %v1308
    %v1377 = vpack.c.b16 %v1311, %v1310
    %v1378 = vpack.c.b16 %v1313, %v1312
    %v1379 = vpack.c.b16 %v1315, %v1314
    %v1380 = vpack.c.b16 %v1317, %v1316
    %v1381 = vpack.c.b16 %v1319, %v1318
    %v1382 = vpack.c.b16 %v1321, %v1320
    %v1383 = vpack.c.b16 %v1323, %v1322
    %v1384 = vpack.c.b16 %v1325, %v1324
    %v1385 = vpack.c.b16 %v1327, %v1326
    %v1386 = vpack.c.b16 %v1329, %v1328
    %v1387 = vpack.c.b16 %v1331, %v1330
    %1444 = vmatprep.subr.bf16.mxu0 0
    %1445 = vmatpush1.bf16.msra.mxu0 %v1332
    %1446 = vmatprep.subr.bf16.mxu0 0
    %1447 = vmatpush1.bf16.msra.mxu0 %v1333
    %1448 = vmatprep.subr.bf16.mxu0 0
    %1449 = vmatpush1.bf16.msra.mxu0 %v1334
    %1450 = vmatprep.subr.bf16.mxu0 0
    %1451 = vmatpush1.bf16.msra.mxu0 %v1335
    %1452 = vmatprep.subr.bf16.mxu0 0
    %1453 = vmatpush1.bf16.msra.mxu0 %v1336
    %1454 = vmatprep.subr.bf16.mxu0 0
    %1455 = vmatpush1.bf16.msra.mxu0 %v1337
    %1456 = vmatprep.subr.bf16.mxu0 0
    %1457 = vmatpush1.bf16.msra.mxu0 %v1338
    %1458 = vmatprep.subr.bf16.mxu0 0
    %1459 = vmatpush1.bf16.msra.mxu0 %v1339
    %1460 = vmatprep.subr.bf16.mxu0 0
    %1461 = vmatpush1.bf16.msra.mxu0 %v1340
    %1462 = vmatprep.subr.bf16.mxu0 0
    %1463 = vmatpush1.bf16.msra.mxu0 %v1341
    %1464 = vmatprep.subr.bf16.mxu0 0
    %1465 = vmatpush1.bf16.msra.mxu0 %v1342
    %1466 = vmatprep.subr.bf16.mxu0 0
    %1467 = vmatpush1.bf16.msra.mxu0 %v1343
    %1468 = vmatprep.subr.bf16.mxu0 0
    %1469 = vmatpush1.bf16.msra.mxu0 %v1344
    %1470 = vmatprep.subr.bf16.mxu0 0
    %1471 = vmatpush1.bf16.msra.mxu0 %v1345
    %1472 = vmatprep.subr.bf16.mxu0 0
    %1473 = vmatpush1.bf16.msra.mxu0 %v1346
    %1474 = vmatprep.subr.bf16.mxu0 0
    %1475 = vmatpush1.bf16.msra.mxu0 %v1347
    %1476 = vmatprep.mubr.bf16.mxu0 %v983
    %1477 = vmatmul.mubr.bf16.gmra.mrb[0].mxu0 %v982
    %v1478 = vpop.f32.mrb[0].mxu0
    %v1479 = vadd.f32 %v1106, %v1478
    %v1480 = vpop.f32.mrb[0].mxu0
    %v1481 = vpop.f32.mrb[0].mxu0
    %v1482 = vpop.f32.mrb[0].mxu0
    %1483 = vdwg.mxu0
    %1484 = vmatprep.subr.bf16.mxu0 0
    %1485 = vmatpush1.bf16.msra.mxu0 %v1348
    %1486 = vmatprep.subr.bf16.mxu0 0
    %1487 = vmatpush1.bf16.msra.mxu0 %v1349
    %1488 = vmatprep.subr.bf16.mxu0 0
    %1489 = vmatpush1.bf16.msra.mxu0 %v1350
    %1490 = vmatprep.subr.bf16.mxu0 0
    %1491 = vmatpush1.bf16.msra.mxu0 %v1351
    %1492 = vmatprep.subr.bf16.mxu0 0
    %1493 = vmatpush1.bf16.msra.mxu0 %v1352
    %1494 = vmatprep.subr.bf16.mxu0 0
    %1495 = vmatpush1.bf16.msra.mxu0 %v1353
    %1496 = vmatprep.subr.bf16.mxu0 0
    %1497 = vmatpush1.bf16.msra.mxu0 %v1354
    %1498 = vmatprep.subr.bf16.mxu0 0
    %1499 = vmatpush1.bf16.msra.mxu0 %v1355
    %1500 = vmatprep.subr.bf16.mxu0 0
    %1501 = vmatpush1.bf16.msra.mxu0 %v1356
    %1502 = vmatprep.subr.bf16.mxu0 0
    %1503 = vmatpush1.bf16.msra.mxu0 %v1357
    %1504 = vmatprep.subr.bf16.mxu0 0
    %1505 = vmatpush1.bf16.msra.mxu0 %v1358
    %1506 = vmatprep.subr.bf16.mxu0 0
    %1507 = vmatpush1.bf16.msra.mxu0 %v1359
    %1508 = vmatprep.subr.bf16.mxu0 0
    %1509 = vmatpush1.bf16.msra.mxu0 %v1360
    %1510 = vmatprep.subr.bf16.mxu0 0
    %1511 = vmatpush1.bf16.msra.mxu0 %v1361
    %1512 = vmatprep.subr.bf16.mxu0 0
    %1513 = vmatpush1.bf16.msra.mxu0 %v1362
    %1514 = vmatprep.subr.bf16.mxu0 0
    %1515 = vmatpush1.bf16.msra.mxu0 %v1363
    %1516 = vmatprep.mubr.bf16.mxu0 %v985
    %1517 = vmatmul.mubr.bf16.gmra.mrb[0].mxu0 %v984
    %v1518 = vpop.f32.mrb[0].mxu0
    %v1519 = vadd.f32 %v1479, %v1518
    %v1520 = vpop.f32.mrb[0].mxu0
    %v1521 = vpop.f32.mrb[0].mxu0
    %v1522 = vpop.f32.mrb[0].mxu0
    %1523 = vdwg.mxu0
    %1524 = vmatprep.subr.bf16.mxu0 0
    %1525 = vmatpush1.bf16.msra.mxu0 %v1364
    %1526 = vmatprep.subr.bf16.mxu0 0
    %1527 = vmatpush1.bf16.msra.mxu0 %v1365
    %1528 = vmatprep.subr.bf16.mxu0 0
    %1529 = vmatpush1.bf16.msra.mxu0 %v1366
    %1530 = vmatprep.subr.bf16.mxu0 0
    %1531 = vmatpush1.bf16.msra.mxu0 %v1367
    %1532 = vmatprep.subr.bf16.mxu0 0
    %1533 = vmatpush1.bf16.msra.mxu0 %v1368
    %1534 = vmatprep.subr.bf16.mxu0 0
    %1535 = vmatpush1.bf16.msra.mxu0 %v1369
    %1536 = vmatprep.subr.bf16.mxu0 0
    %1537 = vmatpush1.bf16.msra.mxu0 %v1370
    %1538 = vmatprep.subr.bf16.mxu0 0
    %1539 = vmatpush1.bf16.msra.mxu0 %v1371
    %1540 = vmatprep.subr.bf16.mxu0 0
    %1541 = vmatpush1.bf16.msra.mxu0 %v1372
    %1542 = vmatprep.subr.bf16.mxu0 0
    %1543 = vmatpush1.bf16.msra.mxu0 %v1373
    %1544 = vmatprep.subr.bf16.mxu0 0
    %1545 = vmatpush1.bf16.msra.mxu0 %v1374
    %1546 = vmatprep.subr.bf16.mxu0 0
    %1547 = vmatpush1.bf16.msra.mxu0 %v1375
    %1548 = vmatprep.subr.bf16.mxu0 0
    %1549 = vmatpush1.bf16.msra.mxu0 %v1376
    %1550 = vmatprep.subr.bf16.mxu0 0
    %1551 = vmatpush1.bf16.msra.mxu0 %v1377
    %1552 = vmatprep.subr.bf16.mxu0 0
    %1553 = vmatpush1.bf16.msra.mxu0 %v1378
    %1554 = vmatprep.subr.bf16.mxu0 0
    %1555 = vmatpush1.bf16.msra.mxu0 %v1379
    %1556 = vmatprep.mubr.bf16.mxu0 %v987
    %1557 = vmatmul.mubr.bf16.gmra.mrb[0].mxu0 %v986
    %v1558 = vpop.f32.mrb[0].mxu0
    %v1559 = vadd.f32 %v1519, %v1558
    %v1560 = vpop.f32.mrb[0].mxu0
    %v1561 = vpop.f32.mrb[0].mxu0
    %v1562 = vpop.f32.mrb[0].mxu0
    %1563 = vdwg.mxu0
    %1564 = vmatprep.subr.bf16.mxu0 0
    %1565 = vmatpush1.bf16.msra.mxu0 %v1380
    %1566 = vmatprep.subr.bf16.mxu0 0
    %1567 = vmatpush1.bf16.msra.mxu0 %v1381
    %1568 = vmatprep.subr.bf16.mxu0 0
    %1569 = vmatpush1.bf16.msra.mxu0 %v1382
    %1570 = vmatprep.subr.bf16.mxu0 0
    %1571 = vmatpush1.bf16.msra.mxu0 %v1383
    %1572 = vmatprep.subr.bf16.mxu0 0
    %1573 = vmatpush1.bf16.msra.mxu0 %v1384
    %1574 = vmatprep.subr.bf16.mxu0 0
    %1575 = vmatpush1.bf16.msra.mxu0 %v1385
    %1576 = vmatprep.subr.bf16.mxu0 0
    %1577 = vmatpush1.bf16.msra.mxu0 %v1386
    %1578 = vmatprep.subr.bf16.mxu0 0
    %1579 = vmatpush1.bf16.msra.mxu0 %v1387
    %1580 = vmatprep.subr.bf16.mxu0 0
    %1581 = vmatpush1.bf16.msra.mxu0 0
    %1582 = vmatprep.subr.bf16.mxu0 0
    %1583 = vmatpush1.bf16.msra.mxu0 0
    %1584 = vmatprep.subr.bf16.mxu0 0
    %1585 = vmatpush1.bf16.msra.mxu0 0
    %1586 = vmatprep.subr.bf16.mxu0 0
    %1587 = vmatpush1.bf16.msra.mxu0 0
    %1588 = vmatprep.subr.bf16.mxu0 0
    %1589 = vmatpush1.bf16.msra.mxu0 0
    %1590 = vmatprep.subr.bf16.mxu0 0
    %1591 = vmatpush1.bf16.msra.mxu0 0
    %1592 = vmatprep.subr.bf16.mxu0 0
    %1593 = vmatpush1.bf16.msra.mxu0 0
    %1594 = vmatprep.subr.bf16.mxu0 0
    %1595 = vmatpush1.bf16.msra.mxu0 0
    %1596 = vmatprep.mubr.bf16.mxu0 0
    %1597 = vmatmul.mubr.bf16.gmra.mrb[0].mxu0 %v988
    %v1598 = vpop.f32.mrb[0].mxu0
    %v1599 = vadd.f32 %v1559, %v1598
    %v1600 = vpop.f32.mrb[0].mxu0
    %v1601 = vpop.f32.mrb[0].mxu0
    %v1602 = vpop.f32.mrb[0].mxu0
    %1603 = vdwg.mxu0
    %vm1604 = vcmp.gt.f32.partialorder %v1599, 0.0
    %v1605 = vmul.f32 %v1599, 0.01
    %v1606 = vsel %vm1604, %v1599, %v1605
    %v1607 = vpack.c.bf16 %v1606, %v1606
    %v1608 = vld [vmem:[%s5] sm:$0xf]
    %v1609 = vld [vmem:[%s5 + $0x4] sm:$0x3]
    %v1610 = vld [vmem:[%s6] sm:$0x1]
    %v1612 = vlaneseq
    %v1613 = vshrl.u32 %v1612, 7
    %v1614 = vsub.s32 0, %v1613
    %v1615 = vrot.slane %v1610, %v1614
    %v1619 = vunpack.c.l.b16 %v1608
    %v1620 = vunpack.c.l.b16 %v1609
    %v1621 = vpack.c.b16 %v1620, %v1619
    %vm1622 = vcmask 97280
    %v1624 = vsel %vm1622, %v1607, 0
    %vm1626 = vcmask 1045504
    %v1628 = vsel %vm1626, %v1621, 0
    %1630 = vmatprep.subr.bf16.mxu0 0
    %1631 = vmatpush1.bf16.msra.mxu0 %v1628
    %1632 = vmatprep.subr.bf16.mxu0 0
    %1633 = vmatpush1.bf16.msra.mxu0 0
    %1634 = vmatprep.subr.bf16.mxu0 0
    %1635 = vmatpush1.bf16.msra.mxu0 0
    %1636 = vmatprep.subr.bf16.mxu0 0
    %1637 = vmatpush1.bf16.msra.mxu0 0
    %1638 = vmatprep.subr.bf16.mxu0 0
    %1639 = vmatpush1.bf16.msra.mxu0 0
    %1640 = vmatprep.subr.bf16.mxu0 0
    %1641 = vmatpush1.bf16.msra.mxu0 0
    %1642 = vmatprep.subr.bf16.mxu0 0
    %1643 = vmatpush1.bf16.msra.mxu0 0
    %1644 = vmatprep.subr.bf16.mxu0 0
    %1645 = vmatpush1.bf16.msra.mxu0 0
    %1646 = vmatprep.subr.bf16.mxu0 0
    %1647 = vmatpush1.bf16.msra.mxu0 0
    %1648 = vmatprep.subr.bf16.mxu0 0
    %1649 = vmatpush1.bf16.msra.mxu0 0
    %1650 = vmatprep.subr.bf16.mxu0 0
    %1651 = vmatpush1.bf16.msra.mxu0 0
    %1652 = vmatprep.subr.bf16.mxu0 0
    %1653 = vmatpush1.bf16.msra.mxu0 0
    %1654 = vmatprep.subr.bf16.mxu0 0
    %1655 = vmatpush1.bf16.msra.mxu0 0
    %1656 = vmatprep.subr.bf16.mxu0 0
    %1657 = vmatpush1.bf16.msra.mxu0 0
    %1658 = vmatprep.subr.bf16.mxu0 0
    %1659 = vmatpush1.bf16.msra.mxu0 0
    %1660 = vmatprep.subr.bf16.mxu0 0
    %1661 = vmatpush1.bf16.msra.mxu0 0
    %1662 = vmatprep.mubr.bf16.mxu0 0
    %1663 = vmatmul.mubr.bf16.gmra.mrb[0].mxu0 %v1624
    %v1664 = vpop.f32.mrb[0].mxu0
    %v1665 = vadd.f32 %v1615, %v1664
    %v1666 = vpop.f32.mrb[0].mxu0
    %v1667 = vpop.f32.mrb[0].mxu0
    %v1668 = vpop.f32.mrb[0].mxu0
    %1669 = vdwg.mxu0
    %vm1670 = vcmp.gt.f32.partialorder %v1665, 0.0
    %v1671 = vmul.f32 %v1665, 0.01
    %v1672 = vsel %vm1670, %v1665, %v1671
    %v1673 = vpack.c.bf16 %v1672, %v1672
    %v1674 = vld [vmem:[%s7] sm:$0xf]
    %v1675 = vld [vmem:[%s7 + $0x4] sm:$0xf]
    %v1676 = vld [vmem:[%s7 + $0x8] sm:$0xf]
    %v1677 = vld [vmem:[%s7 + $0xc] sm:$0x7]
    %v1678 = vld [vmem:[%s8] sm:$0x1]
    %v1680 = vlaneseq
    %v1681 = vshrl.u32 %v1680, 7
    %v1682 = vsub.s32 0, %v1681
    %v1683 = vrot.slane %v1678, %v1682
    %v1689 = vunpack.c.l.b16 %v1674
    %v1690 = vunpack.c.l.b16 %v1675
    %v1691 = vunpack.c.l.b16 %v1676
    %v1692 = vunpack.c.l.b16 %v1677
    %v1693 = vpack.c.b16 %v1690, %v1689
    %v1694 = vpack.c.b16 %v1692, %v1691
    %vm1696 = vcmask 244736
    %v1698 = vsel %vm1696, %v1673, 0
    %vm1700 = vcmask 1046528
    %v1702 = vsel %vm1700, %v1694, 0
    %1704 = vmatprep.subr.bf16.mxu0 0
    %1705 = vmatpush1.bf16.msra.mxu0 %v1693
    %1706 = vmatprep.subr.bf16.mxu0 0
    %1707 = vmatpush1.bf16.msra.mxu0 %v1702
    %1708 = vmatprep.subr.bf16.mxu0 0
    %1709 = vmatpush1.bf16.msra.mxu0 0
    %1710 = vmatprep.subr.bf16.mxu0 0
    %1711 = vmatpush1.bf16.msra.mxu0 0
    %1712 = vmatprep.subr.bf16.mxu0 0
    %1713 = vmatpush1.bf16.msra.mxu0 0
    %1714 = vmatprep.subr.bf16.mxu0 0
    %1715 = vmatpush1.bf16.msra.mxu0 0
    %1716 = vmatprep.subr.bf16.mxu0 0
    %1717 = vmatpush1.bf16.msra.mxu0 0
    %1718 = vmatprep.subr.bf16.mxu0 0
    %1719 = vmatpush1.bf16.msra.mxu0 0
    %1720 = vmatprep.subr.bf16.mxu0 0
    %1721 = vmatpush1.bf16.msra.mxu0 0
    %1722 = vmatprep.subr.bf16.mxu0 0
    %1723 = vmatpush1.bf16.msra.mxu0 0
    %1724 = vmatprep.subr.bf16.mxu0 0
    %1725 = vmatpush1.bf16.msra.mxu0 0
    %1726 = vmatprep.subr.bf16.mxu0 0
    %1727 = vmatpush1.bf16.msra.mxu0 0
    %1728 = vmatprep.subr.bf16.mxu0 0
    %1729 = vmatpush1.bf16.msra.mxu0 0
    %1730 = vmatprep.subr.bf16.mxu0 0
    %1731 = vmatpush1.bf16.msra.mxu0 0
    %1732 = vmatprep.subr.bf16.mxu0 0
    %1733 = vmatpush1.bf16.msra.mxu0 0
    %1734 = vmatprep.subr.bf16.mxu0 0
    %1735 = vmatpush1.bf16.msra.mxu0 0
    %1736 = vmatprep.mubr.bf16.mxu0 0
    %1737 = vmatmul.mubr.bf16.gmra.mrb[0].mxu0 %v1698
    %v1738 = vpop.f32.mrb[0].mxu0
    %v1739 = vadd.f32 %v1683, %v1738
    %v1740 = vpop.f32.mrb[0].mxu0
    %v1741 = vpop.f32.mrb[0].mxu0
    %v1742 = vpop.f32.mrb[0].mxu0
    %1743 = vdwg.mxu0
    %vm1744 = vcmp.gt.f32.partialorder %v1739, 0.0
    %v1745 = vmul.f32 %v1739, 0.01
    %v1746 = vsel %vm1744, %v1739, %v1745
    %v1747 = vpack.c.bf16 %v1746, %v1746
    %v1748 = vld [vmem:[%s9] sm:$0xf]
    %v1749 = vld [vmem:[%s9 + $0x4] sm:$0xf]
    %v1750 = vld [vmem:[%s9 + $0x8] sm:$0xf]
    %v1751 = vld [vmem:[%s9 + $0xc] sm:$0x7]
    %v1752 = vld [vmem:[%s10] sm:$0x1]
    %v1754 = vlaneseq
    %v1755 = vshrl.u32 %v1754, 7
    %v1756 = vsub.s32 0, %v1755
    %v1757 = vrot.slane %v1752, %v1756
    %v1763 = vunpack.c.l.b16 %v1748
    %v1764 = vunpack.c.l.b16 %v1749
    %v1765 = vunpack.c.l.b16 %v1750
    %v1766 = vunpack.c.l.b16 %v1751
    %v1767 = vpack.c.b16 %v1764, %v1763
    %v1768 = vpack.c.b16 %v1766, %v1765
    %v1771 = vsel %vm1696, %v1747, 0
    %v1774 = vsel %vm1700, %v1768, 0
    %1776 = vmatprep.subr.bf16.mxu0 0
    %1777 = vmatpush1.bf16.msra.mxu0 %v1767
    %1778 = vmatprep.subr.bf16.mxu0 0
    %1779 = vmatpush1.bf16.msra.mxu0 %v1774
    %1780 = vmatprep.subr.bf16.mxu0 0
    %1781 = vmatpush1.bf16.msra.mxu0 0
    %1782 = vmatprep.subr.bf16.mxu0 0
    %1783 = vmatpush1.bf16.msra.mxu0 0
    %1784 = vmatprep.subr.bf16.mxu0 0
    %1785 = vmatpush1.bf16.msra.mxu0 0
    %1786 = vmatprep.subr.bf16.mxu0 0
    %1787 = vmatpush1.bf16.msra.mxu0 0
    %1788 = vmatprep.subr.bf16.mxu0 0
    %1789 = vmatpush1.bf16.msra.mxu0 0
    %1790 = vmatprep.subr.bf16.mxu0 0
    %1791 = vmatpush1.bf16.msra.mxu0 0
    %1792 = vmatprep.subr.bf16.mxu0 0
    %1793 = vmatpush1.bf16.msra.mxu0 0
    %1794 = vmatprep.subr.bf16.mxu0 0
    %1795 = vmatpush1.bf16.msra.mxu0 0
    %1796 = vmatprep.subr.bf16.mxu0 0
    %1797 = vmatpush1.bf16.msra.mxu0 0
    %1798 = vmatprep.subr.bf16.mxu0 0
    %1799 = vmatpush1.bf16.msra.mxu0 0
    %1800 = vmatprep.subr.bf16.mxu0 0
    %1801 = vmatpush1.bf16.msra.mxu0 0
    %1802 = vmatprep.subr.bf16.mxu0 0
    %1803 = vmatpush1.bf16.msra.mxu0 0
    %1804 = vmatprep.subr.bf16.mxu0 0
    %1805 = vmatpush1.bf16.msra.mxu0 0
    %1806 = vmatprep.subr.bf16.mxu0 0
    %1807 = vmatpush1.bf16.msra.mxu0 0
    %1808 = vmatprep.mubr.bf16.mxu0 0
    %1809 = vmatmul.mubr.bf16.gmra.mrb[0].mxu0 %v1771
    %v1810 = vpop.f32.mrb[0].mxu0
    %v1811 = vadd.f32 %v1757, %v1810
    %v1812 = vpop.f32.mrb[0].mxu0
    %v1813 = vpop.f32.mrb[0].mxu0
    %v1814 = vpop.f32.mrb[0].mxu0
    %1815 = vdwg.mxu0
    %vm1816 = vcmask 31744
    %1817 = vst.msk [vmem:[%s11] sm:$0xff] %vm1816, %v1811
    // Predicated region
    $region50: #{tpu_custom_call.1} parent=1 // pred_check
      _
    $region51: #{tpu_custom_call.1} parent=1 // pred_check_branch
      %1819 = sbr.rel (0) target = $region53
    $region52: #{tpu_custom_call.1} parent=1 // pred_region
      _
    $region53: #{tpu_custom_call.1} parent=1 // pred_fallthru
      _
    // Predicated region
    $region54: #{tpu_custom_call.1} parent=1 // pred_check
      _
    $region55: #{tpu_custom_call.1} parent=1 // pred_check_branch
      %1821 = sbr.rel (0) target = $region57
    $region56: #{tpu_custom_call.1} parent=1 // pred_region
      _
    $region57: #{tpu_custom_call.1} parent=1 // pred_fallthru
      _
    %1822 = vsyncpa [#allocation3], 1

</llo_original>
